<compile_context>
chip_gen: v5e
topology: v5e:2x2
jax: 0.10.0
libtpu: 0.0.40
codegen_flags: <defaults>
</compile_context>

<pallas_src>
import functools

import numpy as np
import jax
import jax.numpy as jnp
from jax import lax
from jax.experimental import pallas as pl
from jax.experimental.pallas import tpu as pltpu


# ----------------------------- module config ------------------------------ #
# get_resnet_pooling_layers(): AdaptiveAvgPool2d target sizes + Linear in-dims.
POOL_SIZES = [(12, 12), (12, 12), (8, 8), (6, 6), (4, 4)]
DIMS = [9216, 9216, 8192, 9216, 8192]          # = C * oh * ow
CHANNELS = [d // (oh * ow) for d, (oh, ow) in zip(DIMS, POOL_SIZES)]  # 64,64,128,256,512


def _adaptive_pool_matrix_1d(in_size: int, out_size: int) -> np.ndarray:
    """1-D averaging matrix reproducing PyTorch AdaptiveAvgPool bin rules."""
    m = np.zeros((out_size, in_size), dtype=np.float64)
    for i in range(out_size):
        start = (i * in_size) // out_size
        end = -(-((i + 1) * in_size) // out_size)  # ceil((i+1)*in/out)
        m[i, start:end] = 1.0 / float(end - start)
    return m


def _pick_tile_k(kp: int, cap: int = 8192) -> int:
    """Largest multiple-of-128 divisor of kp that is <= cap."""
    if kp % 128 != 0:
        return kp                       # fall back to one full block
    best = 128
    d = 256
    while d <= min(kp, cap):
        if kp % d == 0:
            best = d
        d += 128
    return best


# ------------------------------ Pallas kernel ------------------------------ #
def _fused_linear_kernel(x_ref, w_ref, b_ref, o_ref, acc_ref):
    # One grid step of the K-reduction:
    #   x_ref: (N, tk) bf16, w_ref: (nc, tk) bf16, b_ref: (1, nc) f32
    #   acc_ref: (N, nc) f32 VMEM scratch (persists across grid steps)
    k = pl.program_id(0)

    @pl.when(k == 0)
    def _():
        acc_ref[...] = jnp.zeros_like(acc_ref)

    # Contract the lane-dense last dim of both operands (no lane-padded tiles).
    acc_ref[...] += lax.dot_general(
        x_ref[...], w_ref[...],
        dimension_numbers=(((1,), (1,)), ((), ())),
        preferred_element_type=jnp.float32)

    @pl.when(k == pl.num_programs(0) - 1)
    def _():
        o_ref[...] = acc_ref[...] + b_ref[...]


@functools.partial(jax.jit, static_argnames=("tk",))
def _branch_forward(x_nchw, w_folded, bias_2d, *, tk):
    """out = flatten(x) @ w_folded.T + bias, with a K-tiled Pallas matmul."""
    n = x_nchw.shape[0]
    nc, kp = w_folded.shape
    x2 = x_nchw.reshape(n, -1).astype(jnp.bfloat16)
    if x2.shape[1] != kp:                       # zero-pad K to a 128 multiple
        x2 = jnp.pad(x2, ((0, 0), (0, kp - x2.shape[1])))

    return pl.pallas_call(
        _fused_linear_kernel,
        out_shape=jax.ShapeDtypeStruct((n, nc), jnp.float32),
        grid=(kp // tk,),
        in_specs=[
            pl.BlockSpec((n, tk), lambda k: (0, k)),     # activations
            pl.BlockSpec((nc, tk), lambda k: (0, k)),    # folded weight
            pl.BlockSpec((1, nc), lambda k: (0, 0)),     # bias (resident)
        ],
        out_specs=pl.BlockSpec((n, nc), lambda k: (0, 0)),
        scratch_shapes=[pltpu.VMEM((n, nc), jnp.float32)],
        compiler_params=pltpu.CompilerParams(
            dimension_semantics=("arbitrary",)),
    )(x2, w_folded, bias_2d)


# ----------------------------- module wrapper ------------------------------ #
class MultipleLinearLayersPallas:
    """JAX/Pallas port of MultipleLinearLayers('resnet18', nc)."""

    def __init__(self, nc: int, key):
        self.nc = nc
        self.weights = []     # original layout: (W (nc, dim) f32, b (nc,) f32)
        self.biases_2d = []   # (1, nc) f32 device arrays
        for dim in DIMS:
            key, kw, kb = jax.random.split(key, 3)
            bound = 1.0 / np.sqrt(dim)
            W = jax.random.uniform(kw, (nc, dim), jnp.float32, -bound, bound)
            b = jax.random.uniform(kb, (nc,), jnp.float32, -bound, bound)
            self.weights.append((W, b))
            self.biases_2d.append(b[None, :])
        # folded (pool ⊗ linear) weights, cached per (branch, H, W)
        self._folded_cache = {}

    def _folded_weight(self, idx: int, H: int, Wd: int):
        key = (idx, H, Wd)
        cached = self._folded_cache.get(key)
        if cached is not None:
            return cached
        oh, ow = POOL_SIZES[idx]
        C = CHANNELS[idx]
        # Fold in float64 on host, once; cast to bf16 for the kernel.
        Wmat = np.asarray(self.weights[idx][0], dtype=np.float64)   # (nc, C*oh*ow)
        Wr = Wmat.reshape(self.nc, C, oh, ow)
        ph = _adaptive_pool_matrix_1d(H, oh)                        # (oh, H)
        pw = _adaptive_pool_matrix_1d(Wd, ow)                       # (ow, W)
        wf = np.einsum("kcij,ih,jw->kchw", Wr, ph, pw, optimize=True)
        k_dim = C * H * Wd
        wf = wf.reshape(self.nc, k_dim).astype(np.float32)
        kp = -(-k_dim // 128) * 128                                 # pad K to 128
        if kp != k_dim:
            wf = np.pad(wf, ((0, 0), (0, kp - k_dim)))
        tk = _pick_tile_k(kp)
        wf_dev = jnp.asarray(wf).astype(jnp.bfloat16)
        self._folded_cache[key] = (wf_dev, tk)
        return wf_dev, tk

    def __call__(self, inputs):
        """inputs: list of 5 NCHW arrays with channel counts CHANNELS."""
        outs = []
        for idx, x in enumerate(inputs):
            _, _, H, Wd = x.shape
            wf, tk = self._folded_weight(idx, H, Wd)
            outs.append(_branch_forward(x, wf, self.biases_2d[idx], tk=tk))
        return outs


# ------------------------------- reference --------------------------------- #
def _reference_forward(inputs, weights):
    outs = []
    for x, (oh, ow), (W, b) in zip(inputs, POOL_SIZES, weights):
        x = np.asarray(x, dtype=np.float64)
        N, C, H, Wd = x.shape
        pooled = np.zeros((N, C, oh, ow), dtype=np.float64)
        for i in range(oh):
            hs, he = (i * H) // oh, -(-((i + 1) * H) // oh)
            for j in range(ow):
                ws, we = (j * Wd) // ow, -(-((j + 1) * Wd) // ow)
                pooled[:, :, i, j] = x[:, :, hs:he, ws:we].mean(axis=(2, 3))
        flat = pooled.reshape(N, -1)
        outs.append(flat @ np.asarray(W, np.float64).T + np.asarray(b, np.float64))
    return outs


# ---------------------------------- main ------------------------------------ #
if __name__ == "__main__":
    key = jax.random.PRNGKey(0)
    nc = 10
    batch = 2
    # Small resnet18-style feature-map spatial sizes (non-divisible cases
    # included to exercise the exact adaptive-pooling bin rules).
    spatials = [(28, 28), (28, 28), (16, 16), (12, 12), (8, 8)]

    key, mkey = jax.random.split(key)
    model = MultipleLinearLayersPallas(nc, mkey)

    inputs = []
    for C, (H, W) in zip(CHANNELS, spatials):
        key, sub = jax.random.split(key)
        inputs.append(jax.random.normal(sub, (batch, C, H, W), jnp.float32))

    outs = model(inputs)
    outs = [jax.block_until_ready(o) for o in outs]

    refs = _reference_forward(inputs, model.weights)
    for o, r in zip(outs, refs):
        assert o.shape == (batch, nc)
        np.testing.assert_allclose(np.asarray(o), r, rtol=2e-2, atol=2e-2)

    print("KERNEL_OK")
</pallas_src>

<mosaic_0001>
module attributes {stable_mosaic.version = 11 : i64} {
  func.func @_fused_linear_kernel(%arg0: i32, %arg1: memref<2x7168xbf16, #tpu.memory_space<vmem>>, %arg2: memref<10x7168xbf16, #tpu.memory_space<vmem>>, %arg3: memref<1x10xf32, #tpu.memory_space<vmem>>, %arg4: memref<2x10xf32, #tpu.memory_space<vmem>>, %arg5: memref<2x10xf32, #tpu.memory_space<vmem>>) attributes {dimension_semantics = [#tpu.dimension_semantics<arbitrary>], iteration_bounds = array<i64: 7>, scalar_prefetch = 0 : i64, scratch_operands = 1 : i64, tpu.core_type = #tpu.core_type<tc>, window_params = [{transform_indices = @transform_0, window_bounds = array<i64: 2, 7168>}, {transform_indices = @transform_1, window_bounds = array<i64: 10, 7168>}, {pipeline_mode = #tpu.pipeline_mode<synchronous>, transform_indices = @transform_2, window_bounds = array<i64: 1, 10>}, {pipeline_mode = #tpu.pipeline_mode<synchronous>, transform_indices = @transform_3, window_bounds = array<i64: 2, 10>}]} {
    %c0_i32 = arith.constant 0 : i32
    %0 = arith.cmpi eq, %arg0, %c0_i32 : i32
    %1 = arith.extui %0 : i1 to i32
    %c0_i32_0 = arith.constant 0 : i32
    %2 = arith.cmpi ne, %1, %c0_i32_0 : i32
    scf.if %2 {
      %cst_9 = arith.constant 0.000000e+00 : f32
      %12 = vector.broadcast %cst_9 : f32 to vector<2x10xf32>
      %c0_10 = arith.constant 0 : index
      %c0_11 = arith.constant 0 : index
      %13 = vector.load %arg5[%c0_10, %c0_11] : memref<2x10xf32, #tpu.memory_space<vmem>>, vector<2x10xf32>
      tpu.vector_store %arg5[%c0_10, %c0_11], %12 {strides = array<i32>} : memref<2x10xf32, #tpu.memory_space<vmem>>, vector<2x10xf32>,
    } else {
    }
    %c0 = arith.constant 0 : index
    %c0_1 = arith.constant 0 : index
    %3 = vector.load %arg5[%c0, %c0_1] : memref<2x10xf32, #tpu.memory_space<vmem>>, vector<2x10xf32>
    %c0_2 = arith.constant 0 : index
    %c0_3 = arith.constant 0 : index
    %4 = vector.load %arg1[%c0_2, %c0_3] : memref<2x7168xbf16, #tpu.memory_space<vmem>>, vector<2x7168xbf16>
    %c0_4 = arith.constant 0 : index
    %c0_5 = arith.constant 0 : index
    %5 = vector.load %arg2[%c0_4, %c0_5] : memref<10x7168xbf16, #tpu.memory_space<vmem>>, vector<10x7168xbf16>
    %cst = arith.constant dense<0.000000e+00> : vector<2x10xf32>
    %6 = tpu.matmul %4, %5, %cst {dimension_numbers = #tpu.dot_dimension_numbers<[1], [1], [0], [0], [0, 0, 1, 0], [], []>} : vector<2x7168xbf16>, vector<10x7168xbf16>, vector<2x10xf32> -> vector<2x10xf32>
    %7 = arith.addf %3, %6 : vector<2x10xf32>
    %c0_6 = arith.constant 0 : index
    %c0_7 = arith.constant 0 : index
    %8 = vector.load %arg5[%c0_6, %c0_7] : memref<2x10xf32, #tpu.memory_space<vmem>>, vector<2x10xf32>
    tpu.vector_store %arg5[%c0_6, %c0_7], %7 {strides = array<i32>} : memref<2x10xf32, #tpu.memory_space<vmem>>, vector<2x10xf32>,
    %c6_i32 = arith.constant 6 : i32
    %9 = arith.cmpi eq, %arg0, %c6_i32 : i32
    %10 = arith.extui %9 : i1 to i32
    %c0_i32_8 = arith.constant 0 : i32
    %11 = arith.cmpi ne, %10, %c0_i32_8 : i32
    scf.if %11 {
      %c0_9 = arith.constant 0 : index
      %c0_10 = arith.constant 0 : index
      %12 = vector.load %arg5[%c0_9, %c0_10] : memref<2x10xf32, #tpu.memory_space<vmem>>, vector<2x10xf32>
      %c0_11 = arith.constant 0 : index
      %c0_12 = arith.constant 0 : index
      %13 = vector.load %arg3[%c0_11, %c0_12] : memref<1x10xf32, #tpu.memory_space<vmem>>, vector<1x10xf32>
      %14 = vector.broadcast %13 : vector<1x10xf32> to vector<2x10xf32>
      %15 = arith.addf %12, %14 : vector<2x10xf32>
      %c0_13 = arith.constant 0 : index
      %c0_14 = arith.constant 0 : index
      %16 = vector.load %arg4[%c0_13, %c0_14] : memref<2x10xf32, #tpu.memory_space<vmem>>, vector<2x10xf32>
      tpu.vector_store %arg4[%c0_13, %c0_14], %15 {strides = array<i32>} : memref<2x10xf32, #tpu.memory_space<vmem>>, vector<2x10xf32>,
    } else {
    }
    return
  }
  func.func @transform_0(%arg0: i32) -> (i32, i32) {
    %c0_i32 = arith.constant 0 : i32
    %c0_i32_0 = arith.constant 0 : i32
    return %c0_i32, %arg0 : i32, i32
  }
  func.func @transform_1(%arg0: i32) -> (i32, i32) {
    %c0_i32 = arith.constant 0 : i32
    %c0_i32_0 = arith.constant 0 : i32
    return %c0_i32, %arg0 : i32, i32
  }
  func.func @transform_2(%arg0: i32) -> (i32, i32) {
    %c0_i32 = arith.constant 0 : i32
    %c0_i32_0 = arith.constant 0 : i32
    %c0_i32_1 = arith.constant 0 : i32
    return %c0_i32, %c0_i32_0 : i32, i32
  }
  func.func @transform_3(%arg0: i32) -> (i32, i32) {
    %c0_i32 = arith.constant 0 : i32
    %c0_i32_0 = arith.constant 0 : i32
    %c0_i32_1 = arith.constant 0 : i32
    return %c0_i32, %c0_i32_0 : i32, i32
  }
}

</mosaic_0001>

<llo_original>
// kernel: _branch_forward.1
$region0: #{_branch_forward.1}
  #allocation0 [shape = 'u32[]', space=smem, size = 0x4, offset = 0x4, fixed_abs, tag = 'smem constant byte address 0x4 - core index']
  #allocation1 [shape = 'u32[72,128]{1,0:T(1,128)}', space=vmem, size = 0x9000, scoped, tag = 'internal scratch']
  #allocation2 [shape = 'f32[2,10]{1,0:T(2,128)}', space=vmem, size = 0x400, scoped, tag = 'scratch operand']
  %s0 = inlined_call_operand.vmem [shape: bf16[2,50176], index: 0, kind: input, shape index: {}]
  %s1 = inlined_call_operand.vmem [shape: bf16[10,50176], index: 1, kind: input, shape index: {}]
  %s2 = inlined_call_operand.vmem [shape: f32[1,10], index: 2, kind: input, shape index: {}]
  %s3 = inlined_call_operand.hbm [shape: f32[2,10], index: 3, kind: output, shape index: {}]
  %s4 = sld [smem:[#allocation0]]
  $region76: #{_branch_forward.1} parent=0
    _
  %s6 = ssub.s32 1, %s4
  %s7 = scalar_select 0, %s6, %s4
  $region1: #{_branch_forward.1} parent=0
    #allocation3 [shape = 'u8[458752]{0}', space=vmem, size = 0x70000, scoped, tag = 'input window, operand 1']
    #allocation4 [shape = 'u8[1024]{0}', space=vmem, size = 0x400, scoped, tag = 'output window, operand 0, single buffered']
    #allocation5 [shape = 's32[2]{0}', space=sflag, size = 0x8, scoped, tag = 'scoped memory for _branch_forward.1']
    %8 = vsyncpa [#allocation5], 0
    loop: start=0, step=1, limit=9
    $region2: #{_branch_forward.1} parent=1 // loop_pre_header
      _
    $region3: #{_branch_forward.1} parent=1 // loop_header
      %s10 = sphi 0, %s14
      %p11 = scmp.ge.s32.totalorder %s10, 9
      %s20 = sphi 0, %s22
      %s23 = sphi 0, %s20
      %s24 = sphi 0, %s23
      %s40 = sphi 0, %s24
      %s46 = sphi 0, %s48
      %s49 = sphi 0, %s46
      %s50 = sphi 0, %s49
      %s66 = sphi 0, %s50
      %s70 = sphi 0, %s70
      %s72 = sphi 0, %s70
      %s73 = sphi 0, %s72
      %s87 = sphi 0, %s73
      %s91 = sphi 0, %s91
      %s93 = sphi 0, %s91
      %s94 = sphi 0, %s93
      %s108 = sphi 0, %s94
    $region4: #{_branch_forward.1} parent=1 // loop_header_branch
      %13 = sbr.rel (%p11) target = $region8
    $region5: #{_branch_forward.1} parent=1 // loop_body
      %s15 = ssub.s32 %s10, 1
      %s16 = ssub.s32 %s10, 2
      %s17 = sadd.s32 %s10, 1
      %s18 = ssub.s32 %s10, %s17
      %p19 = scmp.eq.s32.totalorder %s18, 0
      %s21 = sadd.s32 %s20, 1
      %s22 = scalar_select %p19, %s20, %s21
      %p25 = pneg %p19
      %p26 = scmp.eq.s32.totalorder %s10, 6
      %p27 = por %p25, %p26
      %p28 = scmp.ne.s32.totalorder %s20, %s23
      %p29 = scmp.eq.s32.totalorder %s10, 0
      %p30 = por %p28, %p29
      %p31 = scmp.ne.s32.totalorder %s20, %s23
      %p32 = scmp.eq.s32.totalorder %s15, 6
      %p33 = por %p31, %p32
      %p34 = scmp.ne.s32.totalorder %s23, %s24
      %p35 = scmp.eq.s32.totalorder %s15, 0
      %p36 = por %p34, %p35
      %p37 = scmp.ne.s32.totalorder %s23, %s24
      %p38 = scmp.eq.s32.totalorder %s16, 6
      %p39 = por %p37, %p38
      %p41 = scmp.ne.s32.totalorder %s24, %s40
      %p42 = scmp.eq.s32.totalorder %s16, 0
      %p43 = por %p41, %p42
      %s44 = ssub.s32 %s10, %s17
      %p45 = scmp.eq.s32.totalorder %s44, 0
      %s47 = sadd.s32 %s46, 1
      %s48 = scalar_select %p45, %s46, %s47
      %p51 = pneg %p45
      %p52 = scmp.eq.s32.totalorder %s10, 6
      %p53 = por %p51, %p52
      %p54 = scmp.ne.s32.totalorder %s46, %s49
      %p55 = scmp.eq.s32.totalorder %s10, 0
      %p56 = por %p54, %p55
      %p57 = scmp.ne.s32.totalorder %s46, %s49
      %p58 = scmp.eq.s32.totalorder %s15, 6
      %p59 = por %p57, %p58
      %p60 = scmp.ne.s32.totalorder %s49, %s50
      %p61 = scmp.eq.s32.totalorder %s15, 0
      %p62 = por %p60, %p61
      %p63 = scmp.ne.s32.totalorder %s49, %s50
      %p64 = scmp.eq.s32.totalorder %s16, 6
      %p65 = por %p63, %p64
      %p67 = scmp.ne.s32.totalorder %s50, %s66
      %p68 = scmp.eq.s32.totalorder %s16, 0
      %p69 = por %p67, %p68
      %s71 = sadd.s32 %s70, 1
      %p74 = scmp.eq.s32.totalorder %s10, 6
      %p75 = scmp.ne.s32.totalorder %s70, %s72
      %p76 = scmp.eq.s32.totalorder %s10, 0
      %p77 = por %p75, %p76
      %p78 = scmp.ne.s32.totalorder %s70, %s72
      %p79 = scmp.eq.s32.totalorder %s15, 6
      %p80 = por %p78, %p79
      %p81 = scmp.ne.s32.totalorder %s72, %s73
      %p82 = scmp.eq.s32.totalorder %s15, 0
      %p83 = por %p81, %p82
      %p84 = scmp.ne.s32.totalorder %s72, %s73
      %p85 = scmp.eq.s32.totalorder %s16, 6
      %p86 = por %p84, %p85
      %p88 = scmp.ne.s32.totalorder %s73, %s87
      %p89 = scmp.eq.s32.totalorder %s16, 0
      %p90 = por %p88, %p89
      %s92 = sadd.s32 %s91, 1
      %p95 = scmp.eq.s32.totalorder %s10, 6
      %p96 = scmp.ne.s32.totalorder %s91, %s93
      %p97 = scmp.eq.s32.totalorder %s10, 0
      %p98 = por %p96, %p97
      %p99 = scmp.ne.s32.totalorder %s91, %s93
      %p100 = scmp.eq.s32.totalorder %s15, 6
      %p101 = por %p99, %p100
      %p102 = scmp.ne.s32.totalorder %s93, %s94
      %p103 = scmp.eq.s32.totalorder %s15, 0
      %p104 = por %p102, %p103
      %p105 = scmp.ne.s32.totalorder %s93, %s94
      %p106 = scmp.eq.s32.totalorder %s16, 6
      %p107 = por %p105, %p106
      %p109 = scmp.ne.s32.totalorder %s94, %s108
      %p110 = scmp.eq.s32.totalorder %s16, 0
      %p111 = por %p109, %p110
      %p112 = scmp.le.s32.totalorder 1, %s10
      %p113 = scmp.lt.s32.totalorder %s10, 8
      %p114 = pnand %p112, %p113
      %p115 = pneg %p114
      // Predicated region
      $region9: #{_branch_forward.1} parent=5 // pred_check
        _
      $region10: #{_branch_forward.1} parent=5 // pred_check_branch
        %117 = sbr.rel (%p114) target = $region12
      $region11: #{_branch_forward.1} parent=5 // pred_region
        %s118 = ssub.s32 %s10, 1
        // Predicated region
        $region13: #{_branch_forward.1} parent=11 // pred_check
          %p119 = pneg %p83
        $region14: #{_branch_forward.1} parent=11 // pred_check_branch
          %121 = sbr.rel (%p119) target = $region16
        $region15: #{_branch_forward.1} parent=11 // pred_region
          _
        $region16: #{_branch_forward.1} parent=11 // pred_fallthru
          _
      $region12: #{_branch_forward.1} parent=5 // pred_fallthru
        _
      %p122 = scmp.lt.s32.totalorder %s10, 7
      // Predicated region
      $region17: #{_branch_forward.1} parent=5 // pred_check
        %p123 = pneg %p122
      $region18: #{_branch_forward.1} parent=5 // pred_check_branch
        %125 = sbr.rel (%p123) target = $region20
      $region19: #{_branch_forward.1} parent=5 // pred_region
        // Predicated region
        $region21: #{_branch_forward.1} parent=19 // pred_check
          %p126 = pneg %p30
        $region22: #{_branch_forward.1} parent=19 // pred_check_branch
          %128 = sbr.rel (%p126) target = $region24
        $region23: #{_branch_forward.1} parent=19 // pred_region
          %s129 = smul.u32 56, %s10
          %p130 = scmp.lt.s32.totalorder %s129, 391
          %s131 = scalar_select %p130, %s129, 391
          %s132 = scalar_lea.vmem %s0, %s131
          %s133 = smul.u32 56, %s10
        $region24: #{_branch_forward.1} parent=19 // pred_fallthru
          _
        // Predicated region
        $region25: #{_branch_forward.1} parent=19 // pred_check
          %p134 = pneg %p56
        $region26: #{_branch_forward.1} parent=19 // pred_check_branch
          %136 = sbr.rel (%p134) target = $region28
        $region27: #{_branch_forward.1} parent=19 // pred_region
          %s137 = sand.u32 %s46, 1
          %s138 = sand.u32 %s46, 1
          %s139 = smul.addr %s138, 448
          %s140 = scalar_lea.vmem [#allocation3], %s139
          %s141 = smul.u32 56, %s10
          %s142 = smul.addr %s141, 4
          %s143 = scalar_lea.vmem %s1, %s142
          // Predicated region
          $region29: #{_branch_forward.1} parent=27 // pred_check
            _
          $region30: #{_branch_forward.1} parent=27 // pred_check_branch
            %145 = sbr.rel (0) target = $region32
          $region31: #{_branch_forward.1} parent=27 // pred_region
            // Predicated region
            $region33: #{_branch_forward.1} parent=31 // pred_check
              _
            $region34: #{_branch_forward.1} parent=31 // pred_check_branch
              %147 = sbr.rel (0) target = $region36
            $region35: #{_branch_forward.1} parent=31 // pred_region
              loop: start=0, step=1, limit=1
              $region37: #{_branch_forward.1} parent=35 // loop_pre_header
                _
              $region38: #{_branch_forward.1} parent=35 // loop_header
                %s149 = sphi 0, %s153
                %p150 = scmp.ge.s32.totalorder %s149, 1
                %s154 = sphi %s143, %s143
                %s155 = sphi %s140, %s140
              $region39: #{_branch_forward.1} parent=35 // loop_header_branch
                %152 = sbr.rel (%p150) target = $region43
              $region40: #{_branch_forward.1} parent=35 // loop_body
                %v156 = vld [vmem:[%s154] sm:$0xff]
                %157 = vst [vmem:[%s155] sm:$0xff] %v156
                %v158 = vld [vmem:[%s154 + $0x8] sm:$0xff]
                %159 = vst [vmem:[%s155 + $0x8] sm:$0xff] %v158
                %v160 = vld [vmem:[%s154 + $0x10] sm:$0xff]
                %161 = vst [vmem:[%s155 + $0x10] sm:$0xff] %v160
                %v162 = vld [vmem:[%s154 + $0x18] sm:$0xff]
                %163 = vst [vmem:[%s155 + $0x18] sm:$0xff] %v162
                %v164 = vld [vmem:[%s154 + $0x20] sm:$0xff]
                %165 = vst [vmem:[%s155 + $0x20] sm:$0xff] %v164
                %v166 = vld [vmem:[%s154 + $0x28] sm:$0xff]
                %167 = vst [vmem:[%s155 + $0x28] sm:$0xff] %v166
                %v168 = vld [vmem:[%s154 + $0x30] sm:$0xff]
                %169 = vst [vmem:[%s155 + $0x30] sm:$0xff] %v168
                %v170 = vld [vmem:[%s154 + $0x38] sm:$0xff]
                %171 = vst [vmem:[%s155 + $0x38] sm:$0xff] %v170
                %v172 = vld [vmem:[%s154 + $0x40] sm:$0xff]
                %173 = vst [vmem:[%s155 + $0x40] sm:$0xff] %v172
                %v174 = vld [vmem:[%s154 + $0x48] sm:$0xff]
                %175 = vst [vmem:[%s155 + $0x48] sm:$0xff] %v174
                %v176 = vld [vmem:[%s154 + $0x50] sm:$0xff]
                %177 = vst [vmem:[%s155 + $0x50] sm:$0xff] %v176
                %v178 = vld [vmem:[%s154 + $0x58] sm:$0xff]
                %179 = vst [vmem:[%s155 + $0x58] sm:$0xff] %v178
                %v180 = vld [vmem:[%s154 + $0x60] sm:$0xff]
                %181 = vst [vmem:[%s155 + $0x60] sm:$0xff] %v180
                %v182 = vld [vmem:[%s154 + $0x68] sm:$0xff]
                %183 = vst [vmem:[%s155 + $0x68] sm:$0xff] %v182
                %v184 = vld [vmem:[%s154 + $0x70] sm:$0xff]
                %185 = vst [vmem:[%s155 + $0x70] sm:$0xff] %v184
                %v186 = vld [vmem:[%s154 + $0x78] sm:$0xff]
                %187 = vst [vmem:[%s155 + $0x78] sm:$0xff] %v186
                %v188 = vld [vmem:[%s154 + $0x80] sm:$0xff]
                %189 = vst [vmem:[%s155 + $0x80] sm:$0xff] %v188
                %v190 = vld [vmem:[%s154 + $0x88] sm:$0xff]
                %191 = vst [vmem:[%s155 + $0x88] sm:$0xff] %v190
                %v192 = vld [vmem:[%s154 + $0x90] sm:$0xff]
                %193 = vst [vmem:[%s155 + $0x90] sm:$0xff] %v192
                %v194 = vld [vmem:[%s154 + $0x98] sm:$0xff]
                %195 = vst [vmem:[%s155 + $0x98] sm:$0xff] %v194
                %v196 = vld [vmem:[%s154 + $0xa0] sm:$0xff]
                %197 = vst [vmem:[%s155 + $0xa0] sm:$0xff] %v196
                %v198 = vld [vmem:[%s154 + $0xa8] sm:$0xff]
                %199 = vst [vmem:[%s155 + $0xa8] sm:$0xff] %v198
                %v200 = vld [vmem:[%s154 + $0xb0] sm:$0xff]
                %201 = vst [vmem:[%s155 + $0xb0] sm:$0xff] %v200
                %v202 = vld [vmem:[%s154 + $0xb8] sm:$0xff]
                %203 = vst [vmem:[%s155 + $0xb8] sm:$0xff] %v202
                %v204 = vld [vmem:[%s154 + $0xc0] sm:$0xff]
                %205 = vst [vmem:[%s155 + $0xc0] sm:$0xff] %v204
                %v206 = vld [vmem:[%s154 + $0xc8] sm:$0xff]
                %207 = vst [vmem:[%s155 + $0xc8] sm:$0xff] %v206
                %v208 = vld [vmem:[%s154 + $0xd0] sm:$0xff]
                %209 = vst [vmem:[%s155 + $0xd0] sm:$0xff] %v208
                %v210 = vld [vmem:[%s154 + $0xd8] sm:$0xff]
                %211 = vst [vmem:[%s155 + $0xd8] sm:$0xff] %v210
                %v212 = vld [vmem:[%s154 + $0x620] sm:$0xff]
                %213 = vst [vmem:[%s155 + $0xe0] sm:$0xff] %v212
                %v214 = vld [vmem:[%s154 + $0x628] sm:$0xff]
                %215 = vst [vmem:[%s155 + $0xe8] sm:$0xff] %v214
                %v216 = vld [vmem:[%s154 + $0x630] sm:$0xff]
                %217 = vst [vmem:[%s155 + $0xf0] sm:$0xff] %v216
                %v218 = vld [vmem:[%s154 + $0x638] sm:$0xff]
                %219 = vst [vmem:[%s155 + $0xf8] sm:$0xff] %v218
                %v220 = vld [vmem:[%s154 + $0x640] sm:$0xff]
                %221 = vst [vmem:[%s155 + $0x100] sm:$0xff] %v220
                %v222 = vld [vmem:[%s154 + $0x648] sm:$0xff]
                %223 = vst [vmem:[%s155 + $0x108] sm:$0xff] %v222
                %v224 = vld [vmem:[%s154 + $0x650] sm:$0xff]
                %225 = vst [vmem:[%s155 + $0x110] sm:$0xff] %v224
                %v226 = vld [vmem:[%s154 + $0x658] sm:$0xff]
                %227 = vst [vmem:[%s155 + $0x118] sm:$0xff] %v226
                %v228 = vld [vmem:[%s154 + $0x660] sm:$0xff]
                %229 = vst [vmem:[%s155 + $0x120] sm:$0xff] %v228
                %v230 = vld [vmem:[%s154 + $0x668] sm:$0xff]
                %231 = vst [vmem:[%s155 + $0x128] sm:$0xff] %v230
                %v232 = vld [vmem:[%s154 + $0x670] sm:$0xff]
                %233 = vst [vmem:[%s155 + $0x130] sm:$0xff] %v232
                %v234 = vld [vmem:[%s154 + $0x678] sm:$0xff]
                %235 = vst [vmem:[%s155 + $0x138] sm:$0xff] %v234
                %v236 = vld [vmem:[%s154 + $0x680] sm:$0xff]
                %237 = vst [vmem:[%s155 + $0x140] sm:$0xff] %v236
                %v238 = vld [vmem:[%s154 + $0x688] sm:$0xff]
                %239 = vst [vmem:[%s155 + $0x148] sm:$0xff] %v238
                %v240 = vld [vmem:[%s154 + $0x690] sm:$0xff]
                %241 = vst [vmem:[%s155 + $0x150] sm:$0xff] %v240
                %v242 = vld [vmem:[%s154 + $0x698] sm:$0xff]
                %243 = vst [vmem:[%s155 + $0x158] sm:$0xff] %v242
                %v244 = vld [vmem:[%s154 + $0x6a0] sm:$0xff]
                %245 = vst [vmem:[%s155 + $0x160] sm:$0xff] %v244
                %v246 = vld [vmem:[%s154 + $0x6a8] sm:$0xff]
                %247 = vst [vmem:[%s155 + $0x168] sm:$0xff] %v246
                %v248 = vld [vmem:[%s154 + $0x6b0] sm:$0xff]
                %249 = vst [vmem:[%s155 + $0x170] sm:$0xff] %v248
                %v250 = vld [vmem:[%s154 + $0x6b8] sm:$0xff]
                %251 = vst [vmem:[%s155 + $0x178] sm:$0xff] %v250
                %v252 = vld [vmem:[%s154 + $0x6c0] sm:$0xff]
                %253 = vst [vmem:[%s155 + $0x180] sm:$0xff] %v252
                %v254 = vld [vmem:[%s154 + $0x6c8] sm:$0xff]
                %255 = vst [vmem:[%s155 + $0x188] sm:$0xff] %v254
                %v256 = vld [vmem:[%s154 + $0x6d0] sm:$0xff]
                %257 = vst [vmem:[%s155 + $0x190] sm:$0xff] %v256
                %v258 = vld [vmem:[%s154 + $0x6d8] sm:$0xff]
                %259 = vst [vmem:[%s155 + $0x198] sm:$0xff] %v258
                %v260 = vld [vmem:[%s154 + $0x6e0] sm:$0xff]
                %261 = vst [vmem:[%s155 + $0x1a0] sm:$0xff] %v260
                %v262 = vld [vmem:[%s154 + $0x6e8] sm:$0xff]
                %263 = vst [vmem:[%s155 + $0x1a8] sm:$0xff] %v262
                %v264 = vld [vmem:[%s154 + $0x6f0] sm:$0xff]
                %265 = vst [vmem:[%s155 + $0x1b0] sm:$0xff] %v264
                %v266 = vld [vmem:[%s154 + $0x6f8] sm:$0xff]
                %267 = vst [vmem:[%s155 + $0x1b8] sm:$0xff] %v266
              $region41: #{_branch_forward.1} parent=35 // loop_footer
                %s153 = sadd.s32 1, %s149
              $region42: #{_branch_forward.1} parent=35 // loop_footer_branch
                %148 = sbr.rel target = $region38
              $region43: #{_branch_forward.1} parent=35 // loop_exit
                _
            $region36: #{_branch_forward.1} parent=31 // pred_fallthru
              _
            // Predicated region
            $region44: #{_branch_forward.1} parent=31 // pred_check
              _
            $region45: #{_branch_forward.1} parent=31 // pred_check_branch
              %269 = sbr.rel target = $region47
            $region46: #{_branch_forward.1} parent=31 // pred_region
              _
            $region47: #{_branch_forward.1} parent=31 // pred_fallthru
              _
          $region32: #{_branch_forward.1} parent=27 // pred_fallthru
            _
          %270 = vnop
        $region28: #{_branch_forward.1} parent=19 // pred_fallthru
          _
      $region20: #{_branch_forward.1} parent=5 // pred_fallthru
        _
      %p271 = scmp.le.s32.totalorder 1, %s10
      %p272 = scmp.lt.s32.totalorder %s10, 8
      %p273 = pnand %p271, %p272
      %p274 = pneg %p273
      // Predicated region
      $region48: #{_branch_forward.1} parent=5 // pred_check
        _
      $region49: #{_branch_forward.1} parent=5 // pred_check_branch
        %276 = sbr.rel (%p273) target = $region51
      $region50: #{_branch_forward.1} parent=5 // pred_region
        %s277 = ssub.s32 %s10, 1
        %s278 = sand.u32 %s49, 1
        %s279 = sand.u32 %s49, 1
        %s280 = smul.addr %s279, 448
        %s281 = scalar_lea.vmem [#allocation3], %s280
        // Predicated region
        $region52: #{_branch_forward.1} parent=50 // pred_check
          %p282 = pneg %p62
        $region53: #{_branch_forward.1} parent=50 // pred_check_branch
          %284 = sbr.rel (%p282) target = $region55
        $region54: #{_branch_forward.1} parent=50 // pred_region
          _
        $region55: #{_branch_forward.1} parent=50 // pred_fallthru
          _
        %s285 = smul.u32 56, %s15
        %p286 = scmp.lt.s32.totalorder %s285, 391
        %s287 = scalar_select %p286, %s285, 391
        %s288 = scalar_lea.vmem %s0, %s287
        %p289 = pneg %p36
        %p290 = pneg %p33
        %s291 = sand.u32 %s49, 1
        %s292 = sand.u32 %s49, 1
        %s293 = smul.addr %s292, 448
        %s294 = scalar_lea.vmem [#allocation3], %s293
        %p295 = pneg %p62
        %p296 = pneg %p59
        %p297 = pneg %p83
        %p298 = pneg %p80
        %p299 = pneg %p104
        %p300 = pneg %p101
        %s301 = smul.u32 56, %s15
        %p302 = scmp.lt.s32.totalorder %s301, 391
        %s303 = scalar_select %p302, %s301, 391
        %s304 = scalar_lea.vmem %s0, %s303
        %s305 = smul.u32 56, %s15
        %s306 = smul.u32 56, %s15
        %p308 = scmp.eq.s32.totalorder %s15, 0
        // Predicated region
        $region56: #{_branch_forward.1} parent=50 // pred_check
          %p309 = pneg %p308
        $region57: #{_branch_forward.1} parent=50 // pred_check_branch
          %311 = sbr.rel (%p309) target = $region59
        $region58: #{_branch_forward.1} parent=50 // pred_region
          %vm312 = vcmask 74752
          %313 = vst.msk [vmem:[#allocation2] sm:$0x3] %vm312, 0.0
        $region59: #{_branch_forward.1} parent=50 // pred_fallthru
          _
        %v314 = vld [vmem:[#allocation2] sm:$0x3]
        %v315 = vld [vmem:[%s304] sm:$0xff]
        %v316 = vld [vmem:[%s304 + $0x8] sm:$0xff]
        %v317 = vld [vmem:[%s304 + $0x10] sm:$0xff]
        %v318 = vld [vmem:[%s304 + $0x18] sm:$0xff]
        %v319 = vld [vmem:[%s304 + $0x20] sm:$0xff]
        %v320 = vld [vmem:[%s304 + $0x28] sm:$0xff]
        %v321 = vld [vmem:[%s304 + $0x30] sm:$0xff]
        %v322 = vld [vmem:[%s281] sm:$0xff]
        %v323 = vld [vmem:[%s281 + $0x8] sm:$0xff]
        %v324 = vld [vmem:[%s281 + $0x10] sm:$0xff]
        %v325 = vld [vmem:[%s281 + $0x18] sm:$0xff]
        %v326 = vld [vmem:[%s281 + $0x20] sm:$0xff]
        %v327 = vld [vmem:[%s281 + $0x28] sm:$0xff]
        %v328 = vld [vmem:[%s281 + $0x30] sm:$0xff]
        %v329 = vld [vmem:[%s281 + $0x38] sm:$0xff]
        %v330 = vld [vmem:[%s281 + $0x40] sm:$0xff]
        %v331 = vld [vmem:[%s281 + $0x48] sm:$0xff]
        %v332 = vld [vmem:[%s281 + $0x50] sm:$0xff]
        %v333 = vld [vmem:[%s281 + $0x58] sm:$0xff]
        %v334 = vld [vmem:[%s281 + $0x60] sm:$0xff]
        %v335 = vld [vmem:[%s281 + $0x68] sm:$0xff]
        %v336 = vld [vmem:[%s281 + $0x70] sm:$0xff]
        %v337 = vld [vmem:[%s281 + $0x78] sm:$0xff]
        %v338 = vld [vmem:[%s281 + $0x80] sm:$0xff]
        %v339 = vld [vmem:[%s281 + $0x88] sm:$0xff]
        %v340 = vld [vmem:[%s281 + $0x90] sm:$0xff]
        %v341 = vld [vmem:[%s281 + $0x98] sm:$0xff]
        %v342 = vld [vmem:[%s281 + $0xa0] sm:$0xff]
        %v343 = vld [vmem:[%s281 + $0xa8] sm:$0xff]
        %v344 = vld [vmem:[%s281 + $0xb0] sm:$0xff]
        %v345 = vld [vmem:[%s281 + $0xb8] sm:$0xff]
        %v346 = vld [vmem:[%s281 + $0xc0] sm:$0xff]
        %v347 = vld [vmem:[%s281 + $0xc8] sm:$0xff]
        %v348 = vld [vmem:[%s281 + $0xd0] sm:$0xff]
        %v349 = vld [vmem:[%s281 + $0xd8] sm:$0xff]
        %v350 = vld [vmem:[%s281 + $0xe0] sm:$0x11]
        %v351 = vld [vmem:[%s281 + $0xe8] sm:$0x11]
        %v352 = vld [vmem:[%s281 + $0xf0] sm:$0x11]
        %v353 = vld [vmem:[%s281 + $0xf8] sm:$0x11]
        %v354 = vld [vmem:[%s281 + $0x100] sm:$0x11]
        %v355 = vld [vmem:[%s281 + $0x108] sm:$0x11]
        %v356 = vld [vmem:[%s281 + $0x110] sm:$0x11]
        %v357 = vld [vmem:[%s281 + $0x118] sm:$0x11]
        %v358 = vld [vmem:[%s281 + $0x120] sm:$0x11]
        %v359 = vld [vmem:[%s281 + $0x128] sm:$0x11]
        %v360 = vld [vmem:[%s281 + $0x130] sm:$0x11]
        %v361 = vld [vmem:[%s281 + $0x138] sm:$0x11]
        %v362 = vld [vmem:[%s281 + $0x140] sm:$0x11]
        %v363 = vld [vmem:[%s281 + $0x148] sm:$0x11]
        %v364 = vld [vmem:[%s281 + $0x150] sm:$0x11]
        %v365 = vld [vmem:[%s281 + $0x158] sm:$0x11]
        %v366 = vld [vmem:[%s281 + $0x160] sm:$0x11]
        %v367 = vld [vmem:[%s281 + $0x168] sm:$0x11]
        %v368 = vld [vmem:[%s281 + $0x170] sm:$0x11]
        %v369 = vld [vmem:[%s281 + $0x178] sm:$0x11]
        %v370 = vld [vmem:[%s281 + $0x180] sm:$0x11]
        %v371 = vld [vmem:[%s281 + $0x188] sm:$0x11]
        %v372 = vld [vmem:[%s281 + $0x190] sm:$0x11]
        %v373 = vld [vmem:[%s281 + $0x198] sm:$0x11]
        %v374 = vld [vmem:[%s281 + $0x1a0] sm:$0x11]
        %v375 = vld [vmem:[%s281 + $0x1a8] sm:$0x11]
        %v376 = vld [vmem:[%s281 + $0x1b0] sm:$0x11]
        %v377 = vld [vmem:[%s281 + $0x1b8] sm:$0x11]
        %379 = vst [vmem:[#allocation1] ss:$9 sm:$0xff] %v315
        %v380 = vld [vmem:[#allocation1] sm:$0xff]
        %v381 = vld [vmem:[#allocation1 + $0x9] sm:$0xff]
        %v382 = vld [vmem:[#allocation1 + $0x12] sm:$0xff]
        %v383 = vld [vmem:[#allocation1 + $0x1b] sm:$0xff]
        %v384 = vld [vmem:[#allocation1 + $0x24] sm:$0xff]
        %v385 = vld [vmem:[#allocation1 + $0x2d] sm:$0xff]
        %v386 = vld [vmem:[#allocation1 + $0x36] sm:$0xff]
        %v387 = vld [vmem:[#allocation1 + $0x3f] sm:$0xff]
        %389 = vst [vmem:[#allocation1] ss:$9 sm:$0xff] %v316
        %v390 = vld [vmem:[#allocation1] sm:$0xff]
        %v391 = vld [vmem:[#allocation1 + $0x9] sm:$0xff]
        %v392 = vld [vmem:[#allocation1 + $0x12] sm:$0xff]
        %v393 = vld [vmem:[#allocation1 + $0x1b] sm:$0xff]
        %v394 = vld [vmem:[#allocation1 + $0x24] sm:$0xff]
        %v395 = vld [vmem:[#allocation1 + $0x2d] sm:$0xff]
        %v396 = vld [vmem:[#allocation1 + $0x36] sm:$0xff]
        %v397 = vld [vmem:[#allocation1 + $0x3f] sm:$0xff]
        %399 = vst [vmem:[#allocation1] ss:$9 sm:$0xff] %v317
        %v400 = vld [vmem:[#allocation1] sm:$0xff]
        %v401 = vld [vmem:[#allocation1 + $0x9] sm:$0xff]
        %v402 = vld [vmem:[#allocation1 + $0x12] sm:$0xff]
        %v403 = vld [vmem:[#allocation1 + $0x1b] sm:$0xff]
        %v404 = vld [vmem:[#allocation1 + $0x24] sm:$0xff]
        %v405 = vld [vmem:[#allocation1 + $0x2d] sm:$0xff]
        %v406 = vld [vmem:[#allocation1 + $0x36] sm:$0xff]
        %v407 = vld [vmem:[#allocation1 + $0x3f] sm:$0xff]
        %409 = vst [vmem:[#allocation1] ss:$9 sm:$0xff] %v318
        %v410 = vld [vmem:[#allocation1] sm:$0xff]
        %v411 = vld [vmem:[#allocation1 + $0x9] sm:$0xff]
        %v412 = vld [vmem:[#allocation1 + $0x12] sm:$0xff]
        %v413 = vld [vmem:[#allocation1 + $0x1b] sm:$0xff]
        %v414 = vld [vmem:[#allocation1 + $0x24] sm:$0xff]
        %v415 = vld [vmem:[#allocation1 + $0x2d] sm:$0xff]
        %v416 = vld [vmem:[#allocation1 + $0x36] sm:$0xff]
        %v417 = vld [vmem:[#allocation1 + $0x3f] sm:$0xff]
        %419 = vst [vmem:[#allocation1] ss:$9 sm:$0xff] %v319
        %v420 = vld [vmem:[#allocation1] sm:$0xff]
        %v421 = vld [vmem:[#allocation1 + $0x9] sm:$0xff]
        %v422 = vld [vmem:[#allocation1 + $0x12] sm:$0xff]
        %v423 = vld [vmem:[#allocation1 + $0x1b] sm:$0xff]
        %v424 = vld [vmem:[#allocation1 + $0x24] sm:$0xff]
        %v425 = vld [vmem:[#allocation1 + $0x2d] sm:$0xff]
        %v426 = vld [vmem:[#allocation1 + $0x36] sm:$0xff]
        %v427 = vld [vmem:[#allocation1 + $0x3f] sm:$0xff]
        %429 = vst [vmem:[#allocation1] ss:$9 sm:$0xff] %v320
        %v430 = vld [vmem:[#allocation1] sm:$0xff]
        %v431 = vld [vmem:[#allocation1 + $0x9] sm:$0xff]
        %v432 = vld [vmem:[#allocation1 + $0x12] sm:$0xff]
        %v433 = vld [vmem:[#allocation1 + $0x1b] sm:$0xff]
        %v434 = vld [vmem:[#allocation1 + $0x24] sm:$0xff]
        %v435 = vld [vmem:[#allocation1 + $0x2d] sm:$0xff]
        %v436 = vld [vmem:[#allocation1 + $0x36] sm:$0xff]
        %v437 = vld [vmem:[#allocation1 + $0x3f] sm:$0xff]
        %439 = vst [vmem:[#allocation1] ss:$9 sm:$0xff] %v321
        %v440 = vld [vmem:[#allocation1] sm:$0xff]
        %v441 = vld [vmem:[#allocation1 + $0x9] sm:$0xff]
        %v442 = vld [vmem:[#allocation1 + $0x12] sm:$0xff]
        %v443 = vld [vmem:[#allocation1 + $0x1b] sm:$0xff]
        %v444 = vld [vmem:[#allocation1 + $0x24] sm:$0xff]
        %v445 = vld [vmem:[#allocation1 + $0x2d] sm:$0xff]
        %v446 = vld [vmem:[#allocation1 + $0x36] sm:$0xff]
        %v447 = vld [vmem:[#allocation1 + $0x3f] sm:$0xff]
        %v560 = vunpack.c.l.b16 %v322
        %v561 = vunpack.c.h.b16 %v322
        %v562 = vunpack.c.l.b16 %v323
        %v563 = vunpack.c.h.b16 %v323
        %v564 = vunpack.c.l.b16 %v324
        %v565 = vunpack.c.h.b16 %v324
        %v566 = vunpack.c.l.b16 %v325
        %v567 = vunpack.c.h.b16 %v325
        %v568 = vunpack.c.l.b16 %v326
        %v569 = vunpack.c.h.b16 %v326
        %v570 = vunpack.c.l.b16 %v327
        %v571 = vunpack.c.h.b16 %v327
        %v572 = vunpack.c.l.b16 %v328
        %v573 = vunpack.c.h.b16 %v328
        %v574 = vunpack.c.l.b16 %v329
        %v575 = vunpack.c.h.b16 %v329
        %v576 = vunpack.c.l.b16 %v330
        %v577 = vunpack.c.h.b16 %v330
        %v578 = vunpack.c.l.b16 %v331
        %v579 = vunpack.c.h.b16 %v331
        %v580 = vunpack.c.l.b16 %v332
        %v581 = vunpack.c.h.b16 %v332
        %v582 = vunpack.c.l.b16 %v333
        %v583 = vunpack.c.h.b16 %v333
        %v584 = vunpack.c.l.b16 %v334
        %v585 = vunpack.c.h.b16 %v334
        %v586 = vunpack.c.l.b16 %v335
        %v587 = vunpack.c.h.b16 %v335
        %v588 = vunpack.c.l.b16 %v336
        %v589 = vunpack.c.h.b16 %v336
        %v590 = vunpack.c.l.b16 %v337
        %v591 = vunpack.c.h.b16 %v337
        %v592 = vunpack.c.l.b16 %v338
        %v593 = vunpack.c.h.b16 %v338
        %v594 = vunpack.c.l.b16 %v339
        %v595 = vunpack.c.h.b16 %v339
        %v596 = vunpack.c.l.b16 %v340
        %v597 = vunpack.c.h.b16 %v340
        %v598 = vunpack.c.l.b16 %v341
        %v599 = vunpack.c.h.b16 %v341
        %v600 = vunpack.c.l.b16 %v342
        %v601 = vunpack.c.h.b16 %v342
        %v602 = vunpack.c.l.b16 %v343
        %v603 = vunpack.c.h.b16 %v343
        %v604 = vunpack.c.l.b16 %v344
        %v605 = vunpack.c.h.b16 %v344
        %v606 = vunpack.c.l.b16 %v345
        %v607 = vunpack.c.h.b16 %v345
        %v608 = vunpack.c.l.b16 %v346
        %v609 = vunpack.c.h.b16 %v346
        %v610 = vunpack.c.l.b16 %v347
        %v611 = vunpack.c.h.b16 %v347
        %v612 = vunpack.c.l.b16 %v348
        %v613 = vunpack.c.h.b16 %v348
        %v614 = vunpack.c.l.b16 %v349
        %v615 = vunpack.c.h.b16 %v349
        %v616 = vunpack.c.l.b16 %v350
        %v617 = vunpack.c.h.b16 %v350
        %v618 = vunpack.c.l.b16 %v351
        %v619 = vunpack.c.h.b16 %v351
        %v620 = vunpack.c.l.b16 %v352
        %v621 = vunpack.c.h.b16 %v352
        %v622 = vunpack.c.l.b16 %v353
        %v623 = vunpack.c.h.b16 %v353
        %v624 = vunpack.c.l.b16 %v354
        %v625 = vunpack.c.h.b16 %v354
        %v626 = vunpack.c.l.b16 %v355
        %v627 = vunpack.c.h.b16 %v355
        %v628 = vunpack.c.l.b16 %v356
        %v629 = vunpack.c.h.b16 %v356
        %v630 = vunpack.c.l.b16 %v357
        %v631 = vunpack.c.h.b16 %v357
        %v632 = vunpack.c.l.b16 %v358
        %v633 = vunpack.c.h.b16 %v358
        %v634 = vunpack.c.l.b16 %v359
        %v635 = vunpack.c.h.b16 %v359
        %v636 = vunpack.c.l.b16 %v360
        %v637 = vunpack.c.h.b16 %v360
        %v638 = vunpack.c.l.b16 %v361
        %v639 = vunpack.c.h.b16 %v361
        %v640 = vunpack.c.l.b16 %v362
        %v641 = vunpack.c.h.b16 %v362
        %v642 = vunpack.c.l.b16 %v363
        %v643 = vunpack.c.h.b16 %v363
        %v644 = vunpack.c.l.b16 %v364
        %v645 = vunpack.c.h.b16 %v364
        %v646 = vunpack.c.l.b16 %v365
        %v647 = vunpack.c.h.b16 %v365
        %v648 = vunpack.c.l.b16 %v366
        %v649 = vunpack.c.h.b16 %v366
        %v650 = vunpack.c.l.b16 %v367
        %v651 = vunpack.c.h.b16 %v367
        %v652 = vunpack.c.l.b16 %v368
        %v653 = vunpack.c.h.b16 %v368
        %v654 = vunpack.c.l.b16 %v369
        %v655 = vunpack.c.h.b16 %v369
        %v656 = vunpack.c.l.b16 %v370
        %v657 = vunpack.c.h.b16 %v370
        %v658 = vunpack.c.l.b16 %v371
        %v659 = vunpack.c.h.b16 %v371
        %v660 = vunpack.c.l.b16 %v372
        %v661 = vunpack.c.h.b16 %v372
        %v662 = vunpack.c.l.b16 %v373
        %v663 = vunpack.c.h.b16 %v373
        %v664 = vunpack.c.l.b16 %v374
        %v665 = vunpack.c.h.b16 %v374
        %v666 = vunpack.c.l.b16 %v375
        %v667 = vunpack.c.h.b16 %v375
        %v668 = vunpack.c.l.b16 %v376
        %v669 = vunpack.c.h.b16 %v376
        %v670 = vunpack.c.l.b16 %v377
        %v671 = vunpack.c.h.b16 %v377
        %v672 = vpack.c.b16 %v616, %v560
        %v673 = vpack.c.b16 %v617, %v561
        %v674 = vpack.c.b16 %v618, %v562
        %v675 = vpack.c.b16 %v619, %v563
        %v676 = vpack.c.b16 %v620, %v564
        %v677 = vpack.c.b16 %v621, %v565
        %v678 = vpack.c.b16 %v622, %v566
        %v679 = vpack.c.b16 %v623, %v567
        %v680 = vpack.c.b16 %v624, %v568
        %v681 = vpack.c.b16 %v625, %v569
        %v682 = vpack.c.b16 %v626, %v570
        %v683 = vpack.c.b16 %v627, %v571
        %v684 = vpack.c.b16 %v628, %v572
        %v685 = vpack.c.b16 %v629, %v573
        %v686 = vpack.c.b16 %v630, %v574
        %v687 = vpack.c.b16 %v631, %v575
        %v688 = vpack.c.b16 %v632, %v576
        %v689 = vpack.c.b16 %v633, %v577
        %v690 = vpack.c.b16 %v634, %v578
        %v691 = vpack.c.b16 %v635, %v579
        %v692 = vpack.c.b16 %v636, %v580
        %v693 = vpack.c.b16 %v637, %v581
        %v694 = vpack.c.b16 %v638, %v582
        %v695 = vpack.c.b16 %v639, %v583
        %v696 = vpack.c.b16 %v640, %v584
        %v697 = vpack.c.b16 %v641, %v585
        %v698 = vpack.c.b16 %v642, %v586
        %v699 = vpack.c.b16 %v643, %v587
        %v700 = vpack.c.b16 %v644, %v588
        %v701 = vpack.c.b16 %v645, %v589
        %v702 = vpack.c.b16 %v646, %v590
        %v703 = vpack.c.b16 %v647, %v591
        %v704 = vpack.c.b16 %v648, %v592
        %v705 = vpack.c.b16 %v649, %v593
        %v706 = vpack.c.b16 %v650, %v594
        %v707 = vpack.c.b16 %v651, %v595
        %v708 = vpack.c.b16 %v652, %v596
        %v709 = vpack.c.b16 %v653, %v597
        %v710 = vpack.c.b16 %v654, %v598
        %v711 = vpack.c.b16 %v655, %v599
        %v712 = vpack.c.b16 %v656, %v600
        %v713 = vpack.c.b16 %v657, %v601
        %v714 = vpack.c.b16 %v658, %v602
        %v715 = vpack.c.b16 %v659, %v603
        %v716 = vpack.c.b16 %v660, %v604
        %v717 = vpack.c.b16 %v661, %v605
        %v718 = vpack.c.b16 %v662, %v606
        %v719 = vpack.c.b16 %v663, %v607
        %v720 = vpack.c.b16 %v664, %v608
        %v721 = vpack.c.b16 %v665, %v609
        %v722 = vpack.c.b16 %v666, %v610
        %v723 = vpack.c.b16 %v667, %v611
        %v724 = vpack.c.b16 %v668, %v612
        %v725 = vpack.c.b16 %v669, %v613
        %v726 = vpack.c.b16 %v670, %v614
        %v727 = vpack.c.b16 %v671, %v615
        %784 = vmatpush.bf16.xpose.msra.mxu0 0
        %785 = vmatpush.bf16.xpose.msra.mxu0 0
        %786 = vmatpush.bf16.xpose.msra.mxu0 0
        %787 = vmatpush.bf16.xpose.msra.mxu0 0
        %788 = vmatpush.bf16.xpose.msra.mxu0 0
        %789 = vmatpush.bf16.xpose.msra.mxu0 0
        %790 = vmatpush.bf16.xpose.msra.mxu0 0
        %791 = vmatpush.bf16.xpose.msra.mxu0 %v672
        %792 = vmatmul.bf16.gmra.mxu0 %v380
        %v793 = vpop.f32.mrf.mxu0
        %v794 = vadd.f32 0.0, %v793
        %v795 = vpop.f32.mrf.mxu0
        %796 = vdwg.mxu0
        %797 = vmatpush.bf16.xpose.msra.mxu0 0
        %798 = vmatpush.bf16.xpose.msra.mxu0 0
        %799 = vmatpush.bf16.xpose.msra.mxu0 0
        %800 = vmatpush.bf16.xpose.msra.mxu0 0
        %801 = vmatpush.bf16.xpose.msra.mxu0 0
        %802 = vmatpush.bf16.xpose.msra.mxu0 0
        %803 = vmatpush.bf16.xpose.msra.mxu0 0
        %804 = vmatpush.bf16.xpose.msra.mxu0 %v673
        %805 = vmatmul.bf16.gmra.mxu0 %v381
        %v806 = vpop.f32.mrf.mxu0
        %v807 = vadd.f32 %v794, %v806
        %v808 = vpop.f32.mrf.mxu0
        %809 = vdwg.mxu0
        %810 = vmatpush.bf16.xpose.msra.mxu0 0
        %811 = vmatpush.bf16.xpose.msra.mxu0 0
        %812 = vmatpush.bf16.xpose.msra.mxu0 0
        %813 = vmatpush.bf16.xpose.msra.mxu0 0
        %814 = vmatpush.bf16.xpose.msra.mxu0 0
        %815 = vmatpush.bf16.xpose.msra.mxu0 0
        %816 = vmatpush.bf16.xpose.msra.mxu0 0
        %817 = vmatpush.bf16.xpose.msra.mxu0 %v674
        %818 = vmatmul.bf16.gmra.mxu0 %v382
        %v819 = vpop.f32.mrf.mxu0
        %v820 = vadd.f32 %v807, %v819
        %v821 = vpop.f32.mrf.mxu0
        %822 = vdwg.mxu0
        %823 = vmatpush.bf16.xpose.msra.mxu0 0
        %824 = vmatpush.bf16.xpose.msra.mxu0 0
        %825 = vmatpush.bf16.xpose.msra.mxu0 0
        %826 = vmatpush.bf16.xpose.msra.mxu0 0
        %827 = vmatpush.bf16.xpose.msra.mxu0 0
        %828 = vmatpush.bf16.xpose.msra.mxu0 0
        %829 = vmatpush.bf16.xpose.msra.mxu0 0
        %830 = vmatpush.bf16.xpose.msra.mxu0 %v675
        %831 = vmatmul.bf16.gmra.mxu0 %v383
        %v832 = vpop.f32.mrf.mxu0
        %v833 = vadd.f32 %v820, %v832
        %v834 = vpop.f32.mrf.mxu0
        %835 = vdwg.mxu0
        %836 = vmatpush.bf16.xpose.msra.mxu0 0
        %837 = vmatpush.bf16.xpose.msra.mxu0 0
        %838 = vmatpush.bf16.xpose.msra.mxu0 0
        %839 = vmatpush.bf16.xpose.msra.mxu0 0
        %840 = vmatpush.bf16.xpose.msra.mxu0 0
        %841 = vmatpush.bf16.xpose.msra.mxu0 0
        %842 = vmatpush.bf16.xpose.msra.mxu0 0
        %843 = vmatpush.bf16.xpose.msra.mxu0 %v676
        %844 = vmatmul.bf16.gmra.mxu0 %v384
        %v845 = vpop.f32.mrf.mxu0
        %v846 = vadd.f32 %v833, %v845
        %v847 = vpop.f32.mrf.mxu0
        %848 = vdwg.mxu0
        %849 = vmatpush.bf16.xpose.msra.mxu0 0
        %850 = vmatpush.bf16.xpose.msra.mxu0 0
        %851 = vmatpush.bf16.xpose.msra.mxu0 0
        %852 = vmatpush.bf16.xpose.msra.mxu0 0
        %853 = vmatpush.bf16.xpose.msra.mxu0 0
        %854 = vmatpush.bf16.xpose.msra.mxu0 0
        %855 = vmatpush.bf16.xpose.msra.mxu0 0
        %856 = vmatpush.bf16.xpose.msra.mxu0 %v677
        %857 = vmatmul.bf16.gmra.mxu0 %v385
        %v858 = vpop.f32.mrf.mxu0
        %v859 = vadd.f32 %v846, %v858
        %v860 = vpop.f32.mrf.mxu0
        %861 = vdwg.mxu0
        %862 = vmatpush.bf16.xpose.msra.mxu0 0
        %863 = vmatpush.bf16.xpose.msra.mxu0 0
        %864 = vmatpush.bf16.xpose.msra.mxu0 0
        %865 = vmatpush.bf16.xpose.msra.mxu0 0
        %866 = vmatpush.bf16.xpose.msra.mxu0 0
        %867 = vmatpush.bf16.xpose.msra.mxu0 0
        %868 = vmatpush.bf16.xpose.msra.mxu0 0
        %869 = vmatpush.bf16.xpose.msra.mxu0 %v678
        %870 = vmatmul.bf16.gmra.mxu0 %v386
        %v871 = vpop.f32.mrf.mxu0
        %v872 = vadd.f32 %v859, %v871
        %v873 = vpop.f32.mrf.mxu0
        %874 = vdwg.mxu0
        %875 = vmatpush.bf16.xpose.msra.mxu0 0
        %876 = vmatpush.bf16.xpose.msra.mxu0 0
        %877 = vmatpush.bf16.xpose.msra.mxu0 0
        %878 = vmatpush.bf16.xpose.msra.mxu0 0
        %879 = vmatpush.bf16.xpose.msra.mxu0 0
        %880 = vmatpush.bf16.xpose.msra.mxu0 0
        %881 = vmatpush.bf16.xpose.msra.mxu0 0
        %882 = vmatpush.bf16.xpose.msra.mxu0 %v679
        %883 = vmatmul.bf16.gmra.mxu0 %v387
        %v884 = vpop.f32.mrf.mxu0
        %v885 = vadd.f32 %v872, %v884
        %v886 = vpop.f32.mrf.mxu0
        %887 = vdwg.mxu0
        %888 = vmatpush.bf16.xpose.msra.mxu0 0
        %889 = vmatpush.bf16.xpose.msra.mxu0 0
        %890 = vmatpush.bf16.xpose.msra.mxu0 0
        %891 = vmatpush.bf16.xpose.msra.mxu0 0
        %892 = vmatpush.bf16.xpose.msra.mxu0 0
        %893 = vmatpush.bf16.xpose.msra.mxu0 0
        %894 = vmatpush.bf16.xpose.msra.mxu0 0
        %895 = vmatpush.bf16.xpose.msra.mxu0 %v680
        %896 = vmatmul.bf16.gmra.mxu0 %v390
        %v897 = vpop.f32.mrf.mxu0
        %v898 = vadd.f32 %v885, %v897
        %v899 = vpop.f32.mrf.mxu0
        %900 = vdwg.mxu0
        %901 = vmatpush.bf16.xpose.msra.mxu0 0
        %902 = vmatpush.bf16.xpose.msra.mxu0 0
        %903 = vmatpush.bf16.xpose.msra.mxu0 0
        %904 = vmatpush.bf16.xpose.msra.mxu0 0
        %905 = vmatpush.bf16.xpose.msra.mxu0 0
        %906 = vmatpush.bf16.xpose.msra.mxu0 0
        %907 = vmatpush.bf16.xpose.msra.mxu0 0
        %908 = vmatpush.bf16.xpose.msra.mxu0 %v681
        %909 = vmatmul.bf16.gmra.mxu0 %v391
        %v910 = vpop.f32.mrf.mxu0
        %v911 = vadd.f32 %v898, %v910
        %v912 = vpop.f32.mrf.mxu0
        %913 = vdwg.mxu0
        %914 = vmatpush.bf16.xpose.msra.mxu0 0
        %915 = vmatpush.bf16.xpose.msra.mxu0 0
        %916 = vmatpush.bf16.xpose.msra.mxu0 0
        %917 = vmatpush.bf16.xpose.msra.mxu0 0
        %918 = vmatpush.bf16.xpose.msra.mxu0 0
        %919 = vmatpush.bf16.xpose.msra.mxu0 0
        %920 = vmatpush.bf16.xpose.msra.mxu0 0
        %921 = vmatpush.bf16.xpose.msra.mxu0 %v682
        %922 = vmatmul.bf16.gmra.mxu0 %v392
        %v923 = vpop.f32.mrf.mxu0
        %v924 = vadd.f32 %v911, %v923
        %v925 = vpop.f32.mrf.mxu0
        %926 = vdwg.mxu0
        %927 = vmatpush.bf16.xpose.msra.mxu0 0
        %928 = vmatpush.bf16.xpose.msra.mxu0 0
        %929 = vmatpush.bf16.xpose.msra.mxu0 0
        %930 = vmatpush.bf16.xpose.msra.mxu0 0
        %931 = vmatpush.bf16.xpose.msra.mxu0 0
        %932 = vmatpush.bf16.xpose.msra.mxu0 0
        %933 = vmatpush.bf16.xpose.msra.mxu0 0
        %934 = vmatpush.bf16.xpose.msra.mxu0 %v683
        %935 = vmatmul.bf16.gmra.mxu0 %v393
        %v936 = vpop.f32.mrf.mxu0
        %v937 = vadd.f32 %v924, %v936
        %v938 = vpop.f32.mrf.mxu0
        %939 = vdwg.mxu0
        %940 = vmatpush.bf16.xpose.msra.mxu0 0
        %941 = vmatpush.bf16.xpose.msra.mxu0 0
        %942 = vmatpush.bf16.xpose.msra.mxu0 0
        %943 = vmatpush.bf16.xpose.msra.mxu0 0
        %944 = vmatpush.bf16.xpose.msra.mxu0 0
        %945 = vmatpush.bf16.xpose.msra.mxu0 0
        %946 = vmatpush.bf16.xpose.msra.mxu0 0
        %947 = vmatpush.bf16.xpose.msra.mxu0 %v684
        %948 = vmatmul.bf16.gmra.mxu0 %v394
        %v949 = vpop.f32.mrf.mxu0
        %v950 = vadd.f32 %v937, %v949
        %v951 = vpop.f32.mrf.mxu0
        %952 = vdwg.mxu0
        %953 = vmatpush.bf16.xpose.msra.mxu0 0
        %954 = vmatpush.bf16.xpose.msra.mxu0 0
        %955 = vmatpush.bf16.xpose.msra.mxu0 0
        %956 = vmatpush.bf16.xpose.msra.mxu0 0
        %957 = vmatpush.bf16.xpose.msra.mxu0 0
        %958 = vmatpush.bf16.xpose.msra.mxu0 0
        %959 = vmatpush.bf16.xpose.msra.mxu0 0
        %960 = vmatpush.bf16.xpose.msra.mxu0 %v685
        %961 = vmatmul.bf16.gmra.mxu0 %v395
        %v962 = vpop.f32.mrf.mxu0
        %v963 = vadd.f32 %v950, %v962
        %v964 = vpop.f32.mrf.mxu0
        %965 = vdwg.mxu0
        %966 = vmatpush.bf16.xpose.msra.mxu0 0
        %967 = vmatpush.bf16.xpose.msra.mxu0 0
        %968 = vmatpush.bf16.xpose.msra.mxu0 0
        %969 = vmatpush.bf16.xpose.msra.mxu0 0
        %970 = vmatpush.bf16.xpose.msra.mxu0 0
        %971 = vmatpush.bf16.xpose.msra.mxu0 0
        %972 = vmatpush.bf16.xpose.msra.mxu0 0
        %973 = vmatpush.bf16.xpose.msra.mxu0 %v686
        %974 = vmatmul.bf16.gmra.mxu0 %v396
        %v975 = vpop.f32.mrf.mxu0
        %v976 = vadd.f32 %v963, %v975
        %v977 = vpop.f32.mrf.mxu0
        %978 = vdwg.mxu0
        %979 = vmatpush.bf16.xpose.msra.mxu0 0
        %980 = vmatpush.bf16.xpose.msra.mxu0 0
        %981 = vmatpush.bf16.xpose.msra.mxu0 0
        %982 = vmatpush.bf16.xpose.msra.mxu0 0
        %983 = vmatpush.bf16.xpose.msra.mxu0 0
        %984 = vmatpush.bf16.xpose.msra.mxu0 0
        %985 = vmatpush.bf16.xpose.msra.mxu0 0
        %986 = vmatpush.bf16.xpose.msra.mxu0 %v687
        %987 = vmatmul.bf16.gmra.mxu0 %v397
        %v988 = vpop.f32.mrf.mxu0
        %v989 = vadd.f32 %v976, %v988
        %v990 = vpop.f32.mrf.mxu0
        %991 = vdwg.mxu0
        %992 = vmatpush.bf16.xpose.msra.mxu0 0
        %993 = vmatpush.bf16.xpose.msra.mxu0 0
        %994 = vmatpush.bf16.xpose.msra.mxu0 0
        %995 = vmatpush.bf16.xpose.msra.mxu0 0
        %996 = vmatpush.bf16.xpose.msra.mxu0 0
        %997 = vmatpush.bf16.xpose.msra.mxu0 0
        %998 = vmatpush.bf16.xpose.msra.mxu0 0
        %999 = vmatpush.bf16.xpose.msra.mxu0 %v688
        %1000 = vmatmul.bf16.gmra.mxu0 %v400
        %v1001 = vpop.f32.mrf.mxu0
        %v1002 = vadd.f32 %v989, %v1001
        %v1003 = vpop.f32.mrf.mxu0
        %1004 = vdwg.mxu0
        %1005 = vmatpush.bf16.xpose.msra.mxu0 0
        %1006 = vmatpush.bf16.xpose.msra.mxu0 0
        %1007 = vmatpush.bf16.xpose.msra.mxu0 0
        %1008 = vmatpush.bf16.xpose.msra.mxu0 0
        %1009 = vmatpush.bf16.xpose.msra.mxu0 0
        %1010 = vmatpush.bf16.xpose.msra.mxu0 0
        %1011 = vmatpush.bf16.xpose.msra.mxu0 0
        %1012 = vmatpush.bf16.xpose.msra.mxu0 %v689
        %1013 = vmatmul.bf16.gmra.mxu0 %v401
        %v1014 = vpop.f32.mrf.mxu0
        %v1015 = vadd.f32 %v1002, %v1014
        %v1016 = vpop.f32.mrf.mxu0
        %1017 = vdwg.mxu0
        %1018 = vmatpush.bf16.xpose.msra.mxu0 0
        %1019 = vmatpush.bf16.xpose.msra.mxu0 0
        %1020 = vmatpush.bf16.xpose.msra.mxu0 0
        %1021 = vmatpush.bf16.xpose.msra.mxu0 0
        %1022 = vmatpush.bf16.xpose.msra.mxu0 0
        %1023 = vmatpush.bf16.xpose.msra.mxu0 0
        %1024 = vmatpush.bf16.xpose.msra.mxu0 0
        %1025 = vmatpush.bf16.xpose.msra.mxu0 %v690
        %1026 = vmatmul.bf16.gmra.mxu0 %v402
        %v1027 = vpop.f32.mrf.mxu0
        %v1028 = vadd.f32 %v1015, %v1027
        %v1029 = vpop.f32.mrf.mxu0
        %1030 = vdwg.mxu0
        %1031 = vmatpush.bf16.xpose.msra.mxu0 0
        %1032 = vmatpush.bf16.xpose.msra.mxu0 0
        %1033 = vmatpush.bf16.xpose.msra.mxu0 0
        %1034 = vmatpush.bf16.xpose.msra.mxu0 0
        %1035 = vmatpush.bf16.xpose.msra.mxu0 0
        %1036 = vmatpush.bf16.xpose.msra.mxu0 0
        %1037 = vmatpush.bf16.xpose.msra.mxu0 0
        %1038 = vmatpush.bf16.xpose.msra.mxu0 %v691
        %1039 = vmatmul.bf16.gmra.mxu0 %v403
        %v1040 = vpop.f32.mrf.mxu0
        %v1041 = vadd.f32 %v1028, %v1040
        %v1042 = vpop.f32.mrf.mxu0
        %1043 = vdwg.mxu0
        %1044 = vmatpush.bf16.xpose.msra.mxu0 0
        %1045 = vmatpush.bf16.xpose.msra.mxu0 0
        %1046 = vmatpush.bf16.xpose.msra.mxu0 0
        %1047 = vmatpush.bf16.xpose.msra.mxu0 0
        %1048 = vmatpush.bf16.xpose.msra.mxu0 0
        %1049 = vmatpush.bf16.xpose.msra.mxu0 0
        %1050 = vmatpush.bf16.xpose.msra.mxu0 0
        %1051 = vmatpush.bf16.xpose.msra.mxu0 %v692
        %1052 = vmatmul.bf16.gmra.mxu0 %v404
        %v1053 = vpop.f32.mrf.mxu0
        %v1054 = vadd.f32 %v1041, %v1053
        %v1055 = vpop.f32.mrf.mxu0
        %1056 = vdwg.mxu0
        %1057 = vmatpush.bf16.xpose.msra.mxu0 0
        %1058 = vmatpush.bf16.xpose.msra.mxu0 0
        %1059 = vmatpush.bf16.xpose.msra.mxu0 0
        %1060 = vmatpush.bf16.xpose.msra.mxu0 0
        %1061 = vmatpush.bf16.xpose.msra.mxu0 0
        %1062 = vmatpush.bf16.xpose.msra.mxu0 0
        %1063 = vmatpush.bf16.xpose.msra.mxu0 0
        %1064 = vmatpush.bf16.xpose.msra.mxu0 %v693
        %1065 = vmatmul.bf16.gmra.mxu0 %v405
        %v1066 = vpop.f32.mrf.mxu0
        %v1067 = vadd.f32 %v1054, %v1066
        %v1068 = vpop.f32.mrf.mxu0
        %1069 = vdwg.mxu0
        %1070 = vmatpush.bf16.xpose.msra.mxu0 0
        %1071 = vmatpush.bf16.xpose.msra.mxu0 0
        %1072 = vmatpush.bf16.xpose.msra.mxu0 0
        %1073 = vmatpush.bf16.xpose.msra.mxu0 0
        %1074 = vmatpush.bf16.xpose.msra.mxu0 0
        %1075 = vmatpush.bf16.xpose.msra.mxu0 0
        %1076 = vmatpush.bf16.xpose.msra.mxu0 0
        %1077 = vmatpush.bf16.xpose.msra.mxu0 %v694
        %1078 = vmatmul.bf16.gmra.mxu0 %v406
        %v1079 = vpop.f32.mrf.mxu0
        %v1080 = vadd.f32 %v1067, %v1079
        %v1081 = vpop.f32.mrf.mxu0
        %1082 = vdwg.mxu0
        %1083 = vmatpush.bf16.xpose.msra.mxu0 0
        %1084 = vmatpush.bf16.xpose.msra.mxu0 0
        %1085 = vmatpush.bf16.xpose.msra.mxu0 0
        %1086 = vmatpush.bf16.xpose.msra.mxu0 0
        %1087 = vmatpush.bf16.xpose.msra.mxu0 0
        %1088 = vmatpush.bf16.xpose.msra.mxu0 0
        %1089 = vmatpush.bf16.xpose.msra.mxu0 0
        %1090 = vmatpush.bf16.xpose.msra.mxu0 %v695
        %1091 = vmatmul.bf16.gmra.mxu0 %v407
        %v1092 = vpop.f32.mrf.mxu0
        %v1093 = vadd.f32 %v1080, %v1092
        %v1094 = vpop.f32.mrf.mxu0
        %1095 = vdwg.mxu0
        %1096 = vmatpush.bf16.xpose.msra.mxu0 0
        %1097 = vmatpush.bf16.xpose.msra.mxu0 0
        %1098 = vmatpush.bf16.xpose.msra.mxu0 0
        %1099 = vmatpush.bf16.xpose.msra.mxu0 0
        %1100 = vmatpush.bf16.xpose.msra.mxu0 0
        %1101 = vmatpush.bf16.xpose.msra.mxu0 0
        %1102 = vmatpush.bf16.xpose.msra.mxu0 0
        %1103 = vmatpush.bf16.xpose.msra.mxu0 %v696
        %1104 = vmatmul.bf16.gmra.mxu0 %v410
        %v1105 = vpop.f32.mrf.mxu0
        %v1106 = vadd.f32 %v1093, %v1105
        %v1107 = vpop.f32.mrf.mxu0
        %1108 = vdwg.mxu0
        %1109 = vmatpush.bf16.xpose.msra.mxu0 0
        %1110 = vmatpush.bf16.xpose.msra.mxu0 0
        %1111 = vmatpush.bf16.xpose.msra.mxu0 0
        %1112 = vmatpush.bf16.xpose.msra.mxu0 0
        %1113 = vmatpush.bf16.xpose.msra.mxu0 0
        %1114 = vmatpush.bf16.xpose.msra.mxu0 0
        %1115 = vmatpush.bf16.xpose.msra.mxu0 0
        %1116 = vmatpush.bf16.xpose.msra.mxu0 %v697
        %1117 = vmatmul.bf16.gmra.mxu0 %v411
        %v1118 = vpop.f32.mrf.mxu0
        %v1119 = vadd.f32 %v1106, %v1118
        %v1120 = vpop.f32.mrf.mxu0
        %1121 = vdwg.mxu0
        %1122 = vmatpush.bf16.xpose.msra.mxu0 0
        %1123 = vmatpush.bf16.xpose.msra.mxu0 0
        %1124 = vmatpush.bf16.xpose.msra.mxu0 0
        %1125 = vmatpush.bf16.xpose.msra.mxu0 0
        %1126 = vmatpush.bf16.xpose.msra.mxu0 0
        %1127 = vmatpush.bf16.xpose.msra.mxu0 0
        %1128 = vmatpush.bf16.xpose.msra.mxu0 0
        %1129 = vmatpush.bf16.xpose.msra.mxu0 %v698
        %1130 = vmatmul.bf16.gmra.mxu0 %v412
        %v1131 = vpop.f32.mrf.mxu0
        %v1132 = vadd.f32 %v1119, %v1131
        %v1133 = vpop.f32.mrf.mxu0
        %1134 = vdwg.mxu0
        %1135 = vmatpush.bf16.xpose.msra.mxu0 0
        %1136 = vmatpush.bf16.xpose.msra.mxu0 0
        %1137 = vmatpush.bf16.xpose.msra.mxu0 0
        %1138 = vmatpush.bf16.xpose.msra.mxu0 0
        %1139 = vmatpush.bf16.xpose.msra.mxu0 0
        %1140 = vmatpush.bf16.xpose.msra.mxu0 0
        %1141 = vmatpush.bf16.xpose.msra.mxu0 0
        %1142 = vmatpush.bf16.xpose.msra.mxu0 %v699
        %1143 = vmatmul.bf16.gmra.mxu0 %v413
        %v1144 = vpop.f32.mrf.mxu0
        %v1145 = vadd.f32 %v1132, %v1144
        %v1146 = vpop.f32.mrf.mxu0
        %1147 = vdwg.mxu0
        %1148 = vmatpush.bf16.xpose.msra.mxu0 0
        %1149 = vmatpush.bf16.xpose.msra.mxu0 0
        %1150 = vmatpush.bf16.xpose.msra.mxu0 0
        %1151 = vmatpush.bf16.xpose.msra.mxu0 0
        %1152 = vmatpush.bf16.xpose.msra.mxu0 0
        %1153 = vmatpush.bf16.xpose.msra.mxu0 0
        %1154 = vmatpush.bf16.xpose.msra.mxu0 0
        %1155 = vmatpush.bf16.xpose.msra.mxu0 %v700
        %1156 = vmatmul.bf16.gmra.mxu0 %v414
        %v1157 = vpop.f32.mrf.mxu0
        %v1158 = vadd.f32 %v1145, %v1157
        %v1159 = vpop.f32.mrf.mxu0
        %1160 = vdwg.mxu0
        %1161 = vmatpush.bf16.xpose.msra.mxu0 0
        %1162 = vmatpush.bf16.xpose.msra.mxu0 0
        %1163 = vmatpush.bf16.xpose.msra.mxu0 0
        %1164 = vmatpush.bf16.xpose.msra.mxu0 0
        %1165 = vmatpush.bf16.xpose.msra.mxu0 0
        %1166 = vmatpush.bf16.xpose.msra.mxu0 0
        %1167 = vmatpush.bf16.xpose.msra.mxu0 0
        %1168 = vmatpush.bf16.xpose.msra.mxu0 %v701
        %1169 = vmatmul.bf16.gmra.mxu0 %v415
        %v1170 = vpop.f32.mrf.mxu0
        %v1171 = vadd.f32 %v1158, %v1170
        %v1172 = vpop.f32.mrf.mxu0
        %1173 = vdwg.mxu0
        %1174 = vmatpush.bf16.xpose.msra.mxu0 0
        %1175 = vmatpush.bf16.xpose.msra.mxu0 0
        %1176 = vmatpush.bf16.xpose.msra.mxu0 0
        %1177 = vmatpush.bf16.xpose.msra.mxu0 0
        %1178 = vmatpush.bf16.xpose.msra.mxu0 0
        %1179 = vmatpush.bf16.xpose.msra.mxu0 0
        %1180 = vmatpush.bf16.xpose.msra.mxu0 0
        %1181 = vmatpush.bf16.xpose.msra.mxu0 %v702
        %1182 = vmatmul.bf16.gmra.mxu0 %v416
        %v1183 = vpop.f32.mrf.mxu0
        %v1184 = vadd.f32 %v1171, %v1183
        %v1185 = vpop.f32.mrf.mxu0
        %1186 = vdwg.mxu0
        %1187 = vmatpush.bf16.xpose.msra.mxu0 0
        %1188 = vmatpush.bf16.xpose.msra.mxu0 0
        %1189 = vmatpush.bf16.xpose.msra.mxu0 0
        %1190 = vmatpush.bf16.xpose.msra.mxu0 0
        %1191 = vmatpush.bf16.xpose.msra.mxu0 0
        %1192 = vmatpush.bf16.xpose.msra.mxu0 0
        %1193 = vmatpush.bf16.xpose.msra.mxu0 0
        %1194 = vmatpush.bf16.xpose.msra.mxu0 %v703
        %1195 = vmatmul.bf16.gmra.mxu0 %v417
        %v1196 = vpop.f32.mrf.mxu0
        %v1197 = vadd.f32 %v1184, %v1196
        %v1198 = vpop.f32.mrf.mxu0
        %1199 = vdwg.mxu0
        %1200 = vmatpush.bf16.xpose.msra.mxu0 0
        %1201 = vmatpush.bf16.xpose.msra.mxu0 0
        %1202 = vmatpush.bf16.xpose.msra.mxu0 0
        %1203 = vmatpush.bf16.xpose.msra.mxu0 0
        %1204 = vmatpush.bf16.xpose.msra.mxu0 0
        %1205 = vmatpush.bf16.xpose.msra.mxu0 0
        %1206 = vmatpush.bf16.xpose.msra.mxu0 0
        %1207 = vmatpush.bf16.xpose.msra.mxu0 %v704
        %1208 = vmatmul.bf16.gmra.mxu0 %v420
        %v1209 = vpop.f32.mrf.mxu0
        %v1210 = vadd.f32 %v1197, %v1209
        %v1211 = vpop.f32.mrf.mxu0
        %1212 = vdwg.mxu0
        %1213 = vmatpush.bf16.xpose.msra.mxu0 0
        %1214 = vmatpush.bf16.xpose.msra.mxu0 0
        %1215 = vmatpush.bf16.xpose.msra.mxu0 0
        %1216 = vmatpush.bf16.xpose.msra.mxu0 0
        %1217 = vmatpush.bf16.xpose.msra.mxu0 0
        %1218 = vmatpush.bf16.xpose.msra.mxu0 0
        %1219 = vmatpush.bf16.xpose.msra.mxu0 0
        %1220 = vmatpush.bf16.xpose.msra.mxu0 %v705
        %1221 = vmatmul.bf16.gmra.mxu0 %v421
        %v1222 = vpop.f32.mrf.mxu0
        %v1223 = vadd.f32 %v1210, %v1222
        %v1224 = vpop.f32.mrf.mxu0
        %1225 = vdwg.mxu0
        %1226 = vmatpush.bf16.xpose.msra.mxu0 0
        %1227 = vmatpush.bf16.xpose.msra.mxu0 0
        %1228 = vmatpush.bf16.xpose.msra.mxu0 0
        %1229 = vmatpush.bf16.xpose.msra.mxu0 0
        %1230 = vmatpush.bf16.xpose.msra.mxu0 0
        %1231 = vmatpush.bf16.xpose.msra.mxu0 0
        %1232 = vmatpush.bf16.xpose.msra.mxu0 0
        %1233 = vmatpush.bf16.xpose.msra.mxu0 %v706
        %1234 = vmatmul.bf16.gmra.mxu0 %v422
        %v1235 = vpop.f32.mrf.mxu0
        %v1236 = vadd.f32 %v1223, %v1235
        %v1237 = vpop.f32.mrf.mxu0
        %1238 = vdwg.mxu0
        %1239 = vmatpush.bf16.xpose.msra.mxu0 0
        %1240 = vmatpush.bf16.xpose.msra.mxu0 0
        %1241 = vmatpush.bf16.xpose.msra.mxu0 0
        %1242 = vmatpush.bf16.xpose.msra.mxu0 0
        %1243 = vmatpush.bf16.xpose.msra.mxu0 0
        %1244 = vmatpush.bf16.xpose.msra.mxu0 0
        %1245 = vmatpush.bf16.xpose.msra.mxu0 0
        %1246 = vmatpush.bf16.xpose.msra.mxu0 %v707
        %1247 = vmatmul.bf16.gmra.mxu0 %v423
        %v1248 = vpop.f32.mrf.mxu0
        %v1249 = vadd.f32 %v1236, %v1248
        %v1250 = vpop.f32.mrf.mxu0
        %1251 = vdwg.mxu0
        %1252 = vmatpush.bf16.xpose.msra.mxu0 0
        %1253 = vmatpush.bf16.xpose.msra.mxu0 0
        %1254 = vmatpush.bf16.xpose.msra.mxu0 0
        %1255 = vmatpush.bf16.xpose.msra.mxu0 0
        %1256 = vmatpush.bf16.xpose.msra.mxu0 0
        %1257 = vmatpush.bf16.xpose.msra.mxu0 0
        %1258 = vmatpush.bf16.xpose.msra.mxu0 0
        %1259 = vmatpush.bf16.xpose.msra.mxu0 %v708
        %1260 = vmatmul.bf16.gmra.mxu0 %v424
        %v1261 = vpop.f32.mrf.mxu0
        %v1262 = vadd.f32 %v1249, %v1261
        %v1263 = vpop.f32.mrf.mxu0
        %1264 = vdwg.mxu0
        %1265 = vmatpush.bf16.xpose.msra.mxu0 0
        %1266 = vmatpush.bf16.xpose.msra.mxu0 0
        %1267 = vmatpush.bf16.xpose.msra.mxu0 0
        %1268 = vmatpush.bf16.xpose.msra.mxu0 0
        %1269 = vmatpush.bf16.xpose.msra.mxu0 0
        %1270 = vmatpush.bf16.xpose.msra.mxu0 0
        %1271 = vmatpush.bf16.xpose.msra.mxu0 0
        %1272 = vmatpush.bf16.xpose.msra.mxu0 %v709
        %1273 = vmatmul.bf16.gmra.mxu0 %v425
        %v1274 = vpop.f32.mrf.mxu0
        %v1275 = vadd.f32 %v1262, %v1274
        %v1276 = vpop.f32.mrf.mxu0
        %1277 = vdwg.mxu0
        %1278 = vmatpush.bf16.xpose.msra.mxu0 0
        %1279 = vmatpush.bf16.xpose.msra.mxu0 0
        %1280 = vmatpush.bf16.xpose.msra.mxu0 0
        %1281 = vmatpush.bf16.xpose.msra.mxu0 0
        %1282 = vmatpush.bf16.xpose.msra.mxu0 0
        %1283 = vmatpush.bf16.xpose.msra.mxu0 0
        %1284 = vmatpush.bf16.xpose.msra.mxu0 0
        %1285 = vmatpush.bf16.xpose.msra.mxu0 %v710
        %1286 = vmatmul.bf16.gmra.mxu0 %v426
        %v1287 = vpop.f32.mrf.mxu0
        %v1288 = vadd.f32 %v1275, %v1287
        %v1289 = vpop.f32.mrf.mxu0
        %1290 = vdwg.mxu0
        %1291 = vmatpush.bf16.xpose.msra.mxu0 0
        %1292 = vmatpush.bf16.xpose.msra.mxu0 0
        %1293 = vmatpush.bf16.xpose.msra.mxu0 0
        %1294 = vmatpush.bf16.xpose.msra.mxu0 0
        %1295 = vmatpush.bf16.xpose.msra.mxu0 0
        %1296 = vmatpush.bf16.xpose.msra.mxu0 0
        %1297 = vmatpush.bf16.xpose.msra.mxu0 0
        %1298 = vmatpush.bf16.xpose.msra.mxu0 %v711
        %1299 = vmatmul.bf16.gmra.mxu0 %v427
        %v1300 = vpop.f32.mrf.mxu0
        %v1301 = vadd.f32 %v1288, %v1300
        %v1302 = vpop.f32.mrf.mxu0
        %1303 = vdwg.mxu0
        %1304 = vmatpush.bf16.xpose.msra.mxu0 0
        %1305 = vmatpush.bf16.xpose.msra.mxu0 0
        %1306 = vmatpush.bf16.xpose.msra.mxu0 0
        %1307 = vmatpush.bf16.xpose.msra.mxu0 0
        %1308 = vmatpush.bf16.xpose.msra.mxu0 0
        %1309 = vmatpush.bf16.xpose.msra.mxu0 0
        %1310 = vmatpush.bf16.xpose.msra.mxu0 0
        %1311 = vmatpush.bf16.xpose.msra.mxu0 %v712
        %1312 = vmatmul.bf16.gmra.mxu0 %v430
        %v1313 = vpop.f32.mrf.mxu0
        %v1314 = vadd.f32 %v1301, %v1313
        %v1315 = vpop.f32.mrf.mxu0
        %1316 = vdwg.mxu0
        %1317 = vmatpush.bf16.xpose.msra.mxu0 0
        %1318 = vmatpush.bf16.xpose.msra.mxu0 0
        %1319 = vmatpush.bf16.xpose.msra.mxu0 0
        %1320 = vmatpush.bf16.xpose.msra.mxu0 0
        %1321 = vmatpush.bf16.xpose.msra.mxu0 0
        %1322 = vmatpush.bf16.xpose.msra.mxu0 0
        %1323 = vmatpush.bf16.xpose.msra.mxu0 0
        %1324 = vmatpush.bf16.xpose.msra.mxu0 %v713
        %1325 = vmatmul.bf16.gmra.mxu0 %v431
        %v1326 = vpop.f32.mrf.mxu0
        %v1327 = vadd.f32 %v1314, %v1326
        %v1328 = vpop.f32.mrf.mxu0
        %1329 = vdwg.mxu0
        %1330 = vmatpush.bf16.xpose.msra.mxu0 0
        %1331 = vmatpush.bf16.xpose.msra.mxu0 0
        %1332 = vmatpush.bf16.xpose.msra.mxu0 0
        %1333 = vmatpush.bf16.xpose.msra.mxu0 0
        %1334 = vmatpush.bf16.xpose.msra.mxu0 0
        %1335 = vmatpush.bf16.xpose.msra.mxu0 0
        %1336 = vmatpush.bf16.xpose.msra.mxu0 0
        %1337 = vmatpush.bf16.xpose.msra.mxu0 %v714
        %1338 = vmatmul.bf16.gmra.mxu0 %v432
        %v1339 = vpop.f32.mrf.mxu0
        %v1340 = vadd.f32 %v1327, %v1339
        %v1341 = vpop.f32.mrf.mxu0
        %1342 = vdwg.mxu0
        %1343 = vmatpush.bf16.xpose.msra.mxu0 0
        %1344 = vmatpush.bf16.xpose.msra.mxu0 0
        %1345 = vmatpush.bf16.xpose.msra.mxu0 0
        %1346 = vmatpush.bf16.xpose.msra.mxu0 0
        %1347 = vmatpush.bf16.xpose.msra.mxu0 0
        %1348 = vmatpush.bf16.xpose.msra.mxu0 0
        %1349 = vmatpush.bf16.xpose.msra.mxu0 0
        %1350 = vmatpush.bf16.xpose.msra.mxu0 %v715
        %1351 = vmatmul.bf16.gmra.mxu0 %v433
        %v1352 = vpop.f32.mrf.mxu0
        %v1353 = vadd.f32 %v1340, %v1352
        %v1354 = vpop.f32.mrf.mxu0
        %1355 = vdwg.mxu0
        %1356 = vmatpush.bf16.xpose.msra.mxu0 0
        %1357 = vmatpush.bf16.xpose.msra.mxu0 0
        %1358 = vmatpush.bf16.xpose.msra.mxu0 0
        %1359 = vmatpush.bf16.xpose.msra.mxu0 0
        %1360 = vmatpush.bf16.xpose.msra.mxu0 0
        %1361 = vmatpush.bf16.xpose.msra.mxu0 0
        %1362 = vmatpush.bf16.xpose.msra.mxu0 0
        %1363 = vmatpush.bf16.xpose.msra.mxu0 %v716
        %1364 = vmatmul.bf16.gmra.mxu0 %v434
        %v1365 = vpop.f32.mrf.mxu0
        %v1366 = vadd.f32 %v1353, %v1365
        %v1367 = vpop.f32.mrf.mxu0
        %1368 = vdwg.mxu0
        %1369 = vmatpush.bf16.xpose.msra.mxu0 0
        %1370 = vmatpush.bf16.xpose.msra.mxu0 0
        %1371 = vmatpush.bf16.xpose.msra.mxu0 0
        %1372 = vmatpush.bf16.xpose.msra.mxu0 0
        %1373 = vmatpush.bf16.xpose.msra.mxu0 0
        %1374 = vmatpush.bf16.xpose.msra.mxu0 0
        %1375 = vmatpush.bf16.xpose.msra.mxu0 0
        %1376 = vmatpush.bf16.xpose.msra.mxu0 %v717
        %1377 = vmatmul.bf16.gmra.mxu0 %v435
        %v1378 = vpop.f32.mrf.mxu0
        %v1379 = vadd.f32 %v1366, %v1378
        %v1380 = vpop.f32.mrf.mxu0
        %1381 = vdwg.mxu0
        %1382 = vmatpush.bf16.xpose.msra.mxu0 0
        %1383 = vmatpush.bf16.xpose.msra.mxu0 0
        %1384 = vmatpush.bf16.xpose.msra.mxu0 0
        %1385 = vmatpush.bf16.xpose.msra.mxu0 0
        %1386 = vmatpush.bf16.xpose.msra.mxu0 0
        %1387 = vmatpush.bf16.xpose.msra.mxu0 0
        %1388 = vmatpush.bf16.xpose.msra.mxu0 0
        %1389 = vmatpush.bf16.xpose.msra.mxu0 %v718
        %1390 = vmatmul.bf16.gmra.mxu0 %v436
        %v1391 = vpop.f32.mrf.mxu0
        %v1392 = vadd.f32 %v1379, %v1391
        %v1393 = vpop.f32.mrf.mxu0
        %1394 = vdwg.mxu0
        %1395 = vmatpush.bf16.xpose.msra.mxu0 0
        %1396 = vmatpush.bf16.xpose.msra.mxu0 0
        %1397 = vmatpush.bf16.xpose.msra.mxu0 0
        %1398 = vmatpush.bf16.xpose.msra.mxu0 0
        %1399 = vmatpush.bf16.xpose.msra.mxu0 0
        %1400 = vmatpush.bf16.xpose.msra.mxu0 0
        %1401 = vmatpush.bf16.xpose.msra.mxu0 0
        %1402 = vmatpush.bf16.xpose.msra.mxu0 %v719
        %1403 = vmatmul.bf16.gmra.mxu0 %v437
        %v1404 = vpop.f32.mrf.mxu0
        %v1405 = vadd.f32 %v1392, %v1404
        %v1406 = vpop.f32.mrf.mxu0
        %1407 = vdwg.mxu0
        %1408 = vmatpush.bf16.xpose.msra.mxu0 0
        %1409 = vmatpush.bf16.xpose.msra.mxu0 0
        %1410 = vmatpush.bf16.xpose.msra.mxu0 0
        %1411 = vmatpush.bf16.xpose.msra.mxu0 0
        %1412 = vmatpush.bf16.xpose.msra.mxu0 0
        %1413 = vmatpush.bf16.xpose.msra.mxu0 0
        %1414 = vmatpush.bf16.xpose.msra.mxu0 0
        %1415 = vmatpush.bf16.xpose.msra.mxu0 %v720
        %1416 = vmatmul.bf16.gmra.mxu0 %v440
        %v1417 = vpop.f32.mrf.mxu0
        %v1418 = vadd.f32 %v1405, %v1417
        %v1419 = vpop.f32.mrf.mxu0
        %1420 = vdwg.mxu0
        %1421 = vmatpush.bf16.xpose.msra.mxu0 0
        %1422 = vmatpush.bf16.xpose.msra.mxu0 0
        %1423 = vmatpush.bf16.xpose.msra.mxu0 0
        %1424 = vmatpush.bf16.xpose.msra.mxu0 0
        %1425 = vmatpush.bf16.xpose.msra.mxu0 0
        %1426 = vmatpush.bf16.xpose.msra.mxu0 0
        %1427 = vmatpush.bf16.xpose.msra.mxu0 0
        %1428 = vmatpush.bf16.xpose.msra.mxu0 %v721
        %1429 = vmatmul.bf16.gmra.mxu0 %v441
        %v1430 = vpop.f32.mrf.mxu0
        %v1431 = vadd.f32 %v1418, %v1430
        %v1432 = vpop.f32.mrf.mxu0
        %1433 = vdwg.mxu0
        %1434 = vmatpush.bf16.xpose.msra.mxu0 0
        %1435 = vmatpush.bf16.xpose.msra.mxu0 0
        %1436 = vmatpush.bf16.xpose.msra.mxu0 0
        %1437 = vmatpush.bf16.xpose.msra.mxu0 0
        %1438 = vmatpush.bf16.xpose.msra.mxu0 0
        %1439 = vmatpush.bf16.xpose.msra.mxu0 0
        %1440 = vmatpush.bf16.xpose.msra.mxu0 0
        %1441 = vmatpush.bf16.xpose.msra.mxu0 %v722
        %1442 = vmatmul.bf16.gmra.mxu0 %v442
        %v1443 = vpop.f32.mrf.mxu0
        %v1444 = vadd.f32 %v1431, %v1443
        %v1445 = vpop.f32.mrf.mxu0
        %1446 = vdwg.mxu0
        %1447 = vmatpush.bf16.xpose.msra.mxu0 0
        %1448 = vmatpush.bf16.xpose.msra.mxu0 0
        %1449 = vmatpush.bf16.xpose.msra.mxu0 0
        %1450 = vmatpush.bf16.xpose.msra.mxu0 0
        %1451 = vmatpush.bf16.xpose.msra.mxu0 0
        %1452 = vmatpush.bf16.xpose.msra.mxu0 0
        %1453 = vmatpush.bf16.xpose.msra.mxu0 0
        %1454 = vmatpush.bf16.xpose.msra.mxu0 %v723
        %1455 = vmatmul.bf16.gmra.mxu0 %v443
        %v1456 = vpop.f32.mrf.mxu0
        %v1457 = vadd.f32 %v1444, %v1456
        %v1458 = vpop.f32.mrf.mxu0
        %1459 = vdwg.mxu0
        %1460 = vmatpush.bf16.xpose.msra.mxu0 0
        %1461 = vmatpush.bf16.xpose.msra.mxu0 0
        %1462 = vmatpush.bf16.xpose.msra.mxu0 0
        %1463 = vmatpush.bf16.xpose.msra.mxu0 0
        %1464 = vmatpush.bf16.xpose.msra.mxu0 0
        %1465 = vmatpush.bf16.xpose.msra.mxu0 0
        %1466 = vmatpush.bf16.xpose.msra.mxu0 0
        %1467 = vmatpush.bf16.xpose.msra.mxu0 %v724
        %1468 = vmatmul.bf16.gmra.mxu0 %v444
        %v1469 = vpop.f32.mrf.mxu0
        %v1470 = vadd.f32 %v1457, %v1469
        %v1471 = vpop.f32.mrf.mxu0
        %1472 = vdwg.mxu0
        %1473 = vmatpush.bf16.xpose.msra.mxu0 0
        %1474 = vmatpush.bf16.xpose.msra.mxu0 0
        %1475 = vmatpush.bf16.xpose.msra.mxu0 0
        %1476 = vmatpush.bf16.xpose.msra.mxu0 0
        %1477 = vmatpush.bf16.xpose.msra.mxu0 0
        %1478 = vmatpush.bf16.xpose.msra.mxu0 0
        %1479 = vmatpush.bf16.xpose.msra.mxu0 0
        %1480 = vmatpush.bf16.xpose.msra.mxu0 %v725
        %1481 = vmatmul.bf16.gmra.mxu0 %v445
        %v1482 = vpop.f32.mrf.mxu0
        %v1483 = vadd.f32 %v1470, %v1482
        %v1484 = vpop.f32.mrf.mxu0
        %1485 = vdwg.mxu0
        %1486 = vmatpush.bf16.xpose.msra.mxu0 0
        %1487 = vmatpush.bf16.xpose.msra.mxu0 0
        %1488 = vmatpush.bf16.xpose.msra.mxu0 0
        %1489 = vmatpush.bf16.xpose.msra.mxu0 0
        %1490 = vmatpush.bf16.xpose.msra.mxu0 0
        %1491 = vmatpush.bf16.xpose.msra.mxu0 0
        %1492 = vmatpush.bf16.xpose.msra.mxu0 0
        %1493 = vmatpush.bf16.xpose.msra.mxu0 %v726
        %1494 = vmatmul.bf16.gmra.mxu0 %v446
        %v1495 = vpop.f32.mrf.mxu0
        %v1496 = vadd.f32 %v1483, %v1495
        %v1497 = vpop.f32.mrf.mxu0
        %1498 = vdwg.mxu0
        %1499 = vmatpush.bf16.xpose.msra.mxu0 0
        %1500 = vmatpush.bf16.xpose.msra.mxu0 0
        %1501 = vmatpush.bf16.xpose.msra.mxu0 0
        %1502 = vmatpush.bf16.xpose.msra.mxu0 0
        %1503 = vmatpush.bf16.xpose.msra.mxu0 0
        %1504 = vmatpush.bf16.xpose.msra.mxu0 0
        %1505 = vmatpush.bf16.xpose.msra.mxu0 0
        %1506 = vmatpush.bf16.xpose.msra.mxu0 %v727
        %1507 = vmatmul.bf16.gmra.mxu0 %v447
        %v1508 = vpop.f32.mrf.mxu0
        %v1509 = vadd.f32 %v1496, %v1508
        %v1510 = vpop.f32.mrf.mxu0
        %1511 = vdwg.mxu0
        %v1512 = vadd.f32 %v314, %v1509
        %vm1513 = vcmask 74752
        %1514 = vst.msk [vmem:[#allocation2] sm:$0x3] %vm1513, %v1512
        %p1515 = scmp.eq.s32.totalorder %s15, 6
        // Predicated region
        $region60: #{_branch_forward.1} parent=50 // pred_check
          %p1516 = pneg %p1515
        $region61: #{_branch_forward.1} parent=50 // pred_check_branch
          %1518 = sbr.rel (%p1516) target = $region63
        $region62: #{_branch_forward.1} parent=50 // pred_region
          %v1519 = vld [vmem:[#allocation2] sm:$0x3]
          %v1520 = vld [vmem:[%s2] sm:$0x1]
          %v1522 = vperm.slane %v1520, 0
          %v1524 = vadd.f32 %v1519, %v1522
          %1525 = vst.msk [vmem:[#allocation4] sm:$0x3] %vm1513, %v1524
        $region63: #{_branch_forward.1} parent=50 // pred_fallthru
          _
        // Predicated region
        $region64: #{_branch_forward.1} parent=50 // pred_check
          %p1526 = pneg %p101
        $region65: #{_branch_forward.1} parent=50 // pred_check_branch
          %1528 = sbr.rel (%p1526) target = $region67
        $region66: #{_branch_forward.1} parent=50 // pred_region
          %1530 = vsyncadd [#allocation5], 0
          %s1532 = sshll.u32 [#allocation4], 4
          %s1533 = int_to_ptr.vmem [resolvable:$true] %s1532
          %s1534 = sshll.u32 %s3, 4
          %s1535 = int_to_ptr.hbm [resolvable:$true] %s1534
          %1537 = dma.vmem_to_hbm [thread:$0]  %s1533, 32, %s1535, [#allocation5]
        $region67: #{_branch_forward.1} parent=50 // pred_fallthru
          _
        // Predicated region
        $region68: #{_branch_forward.1} parent=50 // pred_check
          %p1538 = pneg %p101
        $region69: #{_branch_forward.1} parent=50 // pred_check_branch
          %1540 = sbr.rel (%p1538) target = $region71
        $region70: #{_branch_forward.1} parent=50 // pred_region
          %1542 = dma.done [#allocation5], 32
        $region71: #{_branch_forward.1} parent=50 // pred_fallthru
          _
      $region51: #{_branch_forward.1} parent=5 // pred_fallthru
        _
      %p1543 = scmp.le.s32.totalorder 2, %s10
      // Predicated region
      $region72: #{_branch_forward.1} parent=5 // pred_check
        %p1544 = pneg %p1543
      $region73: #{_branch_forward.1} parent=5 // pred_check_branch
        %1546 = sbr.rel (%p1544) target = $region75
      $region74: #{_branch_forward.1} parent=5 // pred_region
        %s1547 = ssub.s32 %s10, 2
      $region75: #{_branch_forward.1} parent=5 // pred_fallthru
        _
    $region6: #{_branch_forward.1} parent=1 // loop_footer
      %s14 = sadd.s32 1, %s10
    $region7: #{_branch_forward.1} parent=1 // loop_footer_branch
      %9 = sbr.rel target = $region3
    $region8: #{_branch_forward.1} parent=1 // loop_exit
      _
    %1548 = vsyncpa [#allocation5], 1
    %s1549 = scalar_lea.sflag [#allocation5], 1
    %1550 = vsyncpa %s1549, 1

</llo_original>
